<compile_context>
chip_gen: v5e
topology: v5e:2x2
jax: 0.10.0
libtpu: 0.0.40
codegen_flags: <defaults>
</compile_context>

<pallas_src>
import functools

import jax
import jax.numpy as jnp
from jax import lax
from jax.experimental import pallas as pl
from jax.experimental.pallas import tpu as pltpu

EPS = 1e-5  # nn.BatchNorm2d default
_TAPS = tuple((ky, kx) for ky in range(3) for kx in range(3))   # 3x3 tap order
_SUBLANE_PACK_BF16 = 16                                          # bf16 vreg sublane pack


def _round_up(x, m):
    return (x + m - 1) // m * m


def _vmem_limit_bytes():
    """Chip-aware scoped-VMEM budget (v5e/v6e have 128 MiB physical, v7x only 64 MiB)."""
    try:
        kind = jax.devices()[0].device_kind.lower()
    except Exception:
        kind = ""
    if "v7" in kind:
        return 48 * 1024 * 1024
    if "v5" in kind or "v6" in kind:
        return 96 * 1024 * 1024
    return 64 * 1024 * 1024


def _compiler_params():
    # NOTE: "parallel" is the portable choice; on v7x, pltpu.CORE_PARALLEL could be used
    # to force the 2-TensorCore split once verified on that generation.
    return pltpu.CompilerParams(
        dimension_semantics=("parallel",),
        vmem_limit_bytes=_vmem_limit_bytes(),
    )


def _pick_bblk(N, M, cin_p, cout_p, vmem_limit):
    """Images folded into the lane axis per grid step, bounded by a VMEM budget."""
    budget = vmem_limit // 2  # headroom for weights / Mosaic internals

    def step_bytes(b):
        mt = b * M
        mask_b = 2 * 9 * mt * 4                        # f32 tap masks (double-buffered)
        p1 = (2 * 9 * cin_p * mt                       # bf16 im2col scratch
              + 2 * 2 * cin_p * mt                     # double-buffered bf16 x block
              + 2 * 2 * 2 * cout_p * mt                # double-buffered bf16 y1 + ident
              + mask_b)
        p2 = (2 * 9 * cout_p * mt
              + 2 * 2 * cout_p * mt
              + 2 * 2 * cout_p * mt
              + mask_b)
        return max(p1, p2)

    b = max(1, min(N, max(1, 2048 // M)))      # target ~2048 lanes per step
    if N >= 2:                                  # keep >= 2 grid steps for megacore
        b = min(b, max(1, N // 2))
    while N % b:
        b -= 1
    while b > 1 and step_bytes(b) > budget:
        b -= 1
        while N % b:
            b -= 1
    return b


# --------------------------------------------------------------------------------------
# In-kernel helper: 3x3 conv (stride 1, pad 1) on a channel-major (C, B*H*W) slab as one
# im2col MXU matmul.  Rolls/masks in f32, cast to the bf16 scratch at store time.
# --------------------------------------------------------------------------------------
def _im2col_matmul(src_f32, w_ref, mask_ref, W, col_scratch):
    C, Mt = src_f32.shape
    for t, (ky, kx) in enumerate(_TAPS):
        dy, dx = ky - 1, kx - 1
        s = dy * W + dx                       # tap value at pixel m is src[:, m + s]
        v = src_f32 if s == 0 else pltpu.roll(src_f32, (-s) % Mt, axis=1)
        if (dy, dx) != (0, 0):
            v = v * mask_ref[t]               # (1, Mt) 0/1 mask = implicit zero padding
        col_scratch[t * C:(t + 1) * C, :] = v.astype(col_scratch.dtype)
    return jnp.dot(w_ref[...],                # (rows, 9*C) bf16
                   col_scratch[...],          # (9*C, Mt)   bf16
                   preferred_element_type=jnp.float32)


# --------------------------------------------------------------------------------------
# Pass 1: conv1 + fused 1x1 identity conv + per-block BN1 partial statistics
# --------------------------------------------------------------------------------------
def _conv1_ident_stats_kernel(mask_ref, x_ref, w1_ref,
                              y1_ref, id_ref, s1_ref, q1_ref,
                              col_scratch, *, W, c_out_pad):
    x = x_ref[0].astype(jnp.float32)                              # (Cin_p, Mt)
    res = _im2col_matmul(x, w1_ref, mask_ref, W, col_scratch)     # (2*Cout_p, Mt) f32
    y1 = res[:c_out_pad].astype(y1_ref.dtype)                     # bf16 (what pass 2 reads)
    y1f = y1.astype(jnp.float32)                                  # stats on the rounded value
    s1_ref[0] = jnp.sum(y1f, axis=1, keepdims=True)
    q1_ref[0] = jnp.sum(y1f * y1f, axis=1, keepdims=True)
    y1_ref[0] = y1
    id_ref[0] = res[c_out_pad:].astype(id_ref.dtype)              # fused 1x1 identity, bf16


# --------------------------------------------------------------------------------------
# Pass 2: bn1 (folded affine) + ReLU + conv2 + per-block BN2 partial statistics
# --------------------------------------------------------------------------------------
def _bn1_conv2_stats_kernel(mask_ref, y1_ref, sc1_ref, sh1_ref, w2_ref,
                            y2_ref, s2_ref, q2_ref, col_scratch, *, W):
    a = y1_ref[0].astype(jnp.float32) * sc1_ref[...] + sh1_ref[...]
    a = jnp.maximum(a, 0.0)
    acc = _im2col_matmul(a, w2_ref, mask_ref, W, col_scratch)     # (Cout_p, Mt) f32
    y2 = acc.astype(y2_ref.dtype)
    y2f = y2.astype(jnp.float32)
    s2_ref[0] = jnp.sum(y2f, axis=1, keepdims=True)
    q2_ref[0] = jnp.sum(y2f * y2f, axis=1, keepdims=True)
    y2_ref[0] = y2


# --------------------------------------------------------------------------------------
# Pass 3: bn2 (folded affine) + residual add + final ReLU  (pure VPU / mem-bound)
# --------------------------------------------------------------------------------------
def _bn2_residual_kernel(y2_ref, id_ref, sc2_ref, sh2_ref, bm_ref, out_ref):
    y2 = y2_ref[0].astype(jnp.float32) * sc2_ref[...] + sh2_ref[...]
    ident = id_ref[0].astype(jnp.float32) + bm_ref[...]
    out_ref[0] = jnp.maximum(y2 + ident, 0.0).astype(out_ref.dtype)


# --------------------------------------------------------------------------------------
# Host-side glue: fold global one-pass batch statistics into a per-channel affine.
# var = E[x^2] - E[x]^2 in f32, clamped at 0 (cancellation guard; activations here are
# near zero-mean so the one-pass form is benign — Welford would be safer for very
# ill-conditioned activations).
# --------------------------------------------------------------------------------------
def _bn_affine(part_sum, part_sq, gamma, beta, count, c_pad):
    c = gamma.shape[0]
    s = jnp.sum(part_sum, axis=0)[:c, 0]
    q = jnp.sum(part_sq, axis=0)[:c, 0]
    mean = s / count
    var = jnp.maximum(q / count - mean * mean, 0.0)
    scale = gamma.astype(jnp.float32) * lax.rsqrt(var + EPS)
    shift = beta.astype(jnp.float32) - mean * scale
    scale = jnp.pad(scale, (0, c_pad - c)).reshape(c_pad, 1)      # padded channels -> 0
    shift = jnp.pad(shift, (0, c_pad - c)).reshape(c_pad, 1)
    return scale, shift


# --------------------------------------------------------------------------------------
# Wrapper: NCHW in, NCHW out
# --------------------------------------------------------------------------------------
def residual_block_forward(x_nchw, params, out_dtype=jnp.bfloat16):
    w1, g1, b1 = params["w1"], params["g1"], params["b1"]
    w2, g2, b2 = params["w2"], params["g2"], params["b2"]
    wm, bm = params["wm"], params["bm"]

    N, Cin, H, W = x_nchw.shape
    Cout = w1.shape[0]
    M = H * W
    f32, bf16 = jnp.float32, jnp.bfloat16

    cin_p = _round_up(Cin, _SUBLANE_PACK_BF16)      # sublane-aligned channel slabs
    cout_p = _round_up(Cout, _SUBLANE_PACK_BF16)

    vmem_limit = _vmem_limit_bytes()
    B = _pick_bblk(N, M, cin_p, cout_p, vmem_limit)  # images folded into lanes per step
    G = N // B
    Mt = B * M

    # ---- one-time relayout: channel-major, channel-padded, batch folded into lanes ----
    x_cm = x_nchw.reshape(N, Cin, M)
    if cin_p > Cin:
        x_cm = jnp.pad(x_cm, ((0, 0), (0, cin_p - Cin), (0, 0)))
    x_cm = x_cm.astype(bf16)
    x_fold = x_cm.reshape(G, B, cin_p, M).transpose(0, 2, 1, 3).reshape(G, cin_p, Mt)

    # ---- weights: OIHW -> (O_pad, 9*I_pad), tap-major / channel-minor columns ----
    w1_t = jnp.transpose(w1, (0, 2, 3, 1))                            # (Cout,3,3,Cin)
    w1_t = jnp.pad(w1_t, ((0, cout_p - Cout), (0, 0), (0, 0), (0, cin_p - Cin)))
    w1_mat = w1_t.reshape(cout_p, 9 * cin_p)
    # fused 1x1 identity: extra cout_p rows with wm in the centre-tap column block
    wm_t = jnp.zeros((cout_p, 3, 3, cin_p), f32).at[:Cout, 1, 1, :Cin].set(
        wm.reshape(Cout, Cin).astype(f32))
    w1_big = jnp.concatenate([w1_mat, wm_t.reshape(cout_p, 9 * cin_p)],
                             axis=0).astype(bf16)                     # (2*Cout_p, 9*Cin_p)

    w2_t = jnp.transpose(w2, (0, 2, 3, 1))
    w2_t = jnp.pad(w2_t, ((0, cout_p - Cout), (0, 0), (0, 0), (0, cout_p - Cout)))
    w2_mat = w2_t.reshape(cout_p, 9 * cout_p).astype(bf16)

    bm_col = jnp.pad(bm.astype(f32), (0, cout_p - Cout)).reshape(cout_p, 1)

    # ---- precomputed 0/1 boundary masks (the conv's implicit zero padding), per tap ----
    hh = jnp.arange(M, dtype=jnp.int32) // W
    ww = jnp.arange(M, dtype=jnp.int32) % W
    masks = []
    for ky, kx in _TAPS:
        dy, dx = ky - 1, kx - 1
        ok = (hh + dy >= 0) & (hh + dy < H) & (ww + dx >= 0) & (ww + dx < W)
        masks.append(ok)
    tap_masks = jnp.stack(masks, axis=0).astype(f32)[:, None, :]      # (9, 1, M)
    tap_masks = jnp.tile(tap_masks, (1, 1, B))                        # (9, 1, Mt)

    cparams = _compiler_params()
    mask_spec = pl.BlockSpec((9, 1, Mt), lambda i: (0, 0, 0))
    const2 = lambda shp: pl.BlockSpec(shp, lambda i: (0, 0))
    blk = lambda c: pl.BlockSpec((1, c, Mt), lambda i: (i, 0, 0))
    stat_spec = pl.BlockSpec((1, cout_p, 1), lambda i: (i, 0, 0))

    # ------------ pass 1: conv1 + fused 1x1 identity + bn1 stats partials ------------
    y1, ident, s1, q1 = pl.pallas_call(
        functools.partial(_conv1_ident_stats_kernel, W=W, c_out_pad=cout_p),
        grid=(G,),
        in_specs=[mask_spec, blk(cin_p), const2((2 * cout_p, 9 * cin_p))],
        out_specs=(blk(cout_p), blk(cout_p), stat_spec, stat_spec),
        out_shape=(jax.ShapeDtypeStruct((G, cout_p, Mt), bf16),
                   jax.ShapeDtypeStruct((G, cout_p, Mt), bf16),
                   jax.ShapeDtypeStruct((G, cout_p, 1), f32),
                   jax.ShapeDtypeStruct((G, cout_p, 1), f32)),
        scratch_shapes=[pltpu.VMEM((9 * cin_p, Mt), bf16)],
        compiler_params=cparams,
    )(tap_masks, x_fold, w1_big)

    scale1, shift1 = _bn_affine(s1, q1, g1, b1, N * M, cout_p)

    # ------------ pass 2: bn1 + relu + conv2 + bn2 stats partials ------------
    y2, s2, q2 = pl.pallas_call(
        functools.partial(_bn1_conv2_stats_kernel, W=W),
        grid=(G,),
        in_specs=[mask_spec, blk(cout_p), const2((cout_p, 1)), const2((cout_p, 1)),
                  const2((cout_p, 9 * cout_p))],
        out_specs=(blk(cout_p), stat_spec, stat_spec),
        out_shape=(jax.ShapeDtypeStruct((G, cout_p, Mt), bf16),
                   jax.ShapeDtypeStruct((G, cout_p, 1), f32),
                   jax.ShapeDtypeStruct((G, cout_p, 1), f32)),
        scratch_shapes=[pltpu.VMEM((9 * cout_p, Mt), bf16)],
        compiler_params=cparams,
    )(tap_masks, y1, scale1, shift1, w2_mat)

    scale2, shift2 = _bn_affine(s2, q2, g2, b2, N * M, cout_p)

    # ------------ pass 3: bn2 + residual add + relu ------------
    # NOTE: pipeline_mode=pl.Buffered(3) on the y2/ident blocks is a further option if
    # profiling shows exposed DMA here (almost no compute per step).
    out_fold = pl.pallas_call(
        _bn2_residual_kernel,
        grid=(G,),
        in_specs=[blk(cout_p), blk(cout_p), const2((cout_p, 1)), const2((cout_p, 1)),
                  const2((cout_p, 1))],
        out_specs=blk(cout_p),
        out_shape=jax.ShapeDtypeStruct((G, cout_p, Mt), out_dtype),
        compiler_params=cparams,
    )(y2, ident, scale2, shift2, bm_col)

    # unfold batch from lanes, drop padded channels, back to NCHW
    out = out_fold.reshape(G, cout_p, B, M).transpose(0, 2, 1, 3)
    return out.reshape(N, cout_p, H, W)[:, :Cout]


# ---------------- pure-JAX reference (for correctness check) ----------------
def _conv2d_nchw(x, w, padding):
    return lax.conv_general_dilated(
        x, w, window_strides=(1, 1),
        padding=[(padding, padding), (padding, padding)],
        dimension_numbers=("NCHW", "OIHW", "NCHW"))


def _bn_train(x, gamma, beta):
    mean = jnp.mean(x, axis=(0, 2, 3), keepdims=True)
    var = jnp.mean((x - mean) ** 2, axis=(0, 2, 3), keepdims=True)
    return ((x - mean) * lax.rsqrt(var + EPS)
            * gamma[None, :, None, None] + beta[None, :, None, None])


def ref_forward(x, p):
    identity = _conv2d_nchw(x, p["wm"], 0) + p["bm"][None, :, None, None]
    out = jax.nn.relu(_bn_train(_conv2d_nchw(x, p["w1"], 1), p["g1"], p["b1"]))
    out = _bn_train(_conv2d_nchw(out, p["w2"], 1), p["g2"], p["b2"])
    return jax.nn.relu(out + identity)


if __name__ == "__main__":
    N, Cin, Cout, H, W = 2, 4, 8, 16, 16
    key = jax.random.PRNGKey(0)
    kx, k1, k2, k3, k4, k5, k6, k7, k8 = jax.random.split(key, 9)

    x = jax.random.normal(kx, (N, Cin, H, W), jnp.float32)
    params = dict(
        w1=0.1 * jax.random.normal(k1, (Cout, Cin, 3, 3), jnp.float32),
        g1=1.0 + 0.1 * jax.random.normal(k5, (Cout,), jnp.float32),
        b1=0.1 * jax.random.normal(k6, (Cout,), jnp.float32),
        w2=0.1 * jax.random.normal(k2, (Cout, Cout, 3, 3), jnp.float32),
        g2=1.0 + 0.1 * jax.random.normal(k7, (Cout,), jnp.float32),
        b2=0.1 * jax.random.normal(k8, (Cout,), jnp.float32),
        wm=0.1 * jax.random.normal(k3, (Cout, Cin, 1, 1), jnp.float32),
        bm=0.1 * jax.random.normal(k4, (Cout,), jnp.float32),
    )

    out = jax.block_until_ready(jax.jit(residual_block_forward)(x, params))
    ref = jax.block_until_ready(ref_forward(x, params))

    assert out.shape == (N, Cout, H, W), out.shape
    # bf16 matmul operands / bf16 HBM activations / bf16 final output -> compare against
    # the f32 reference with a bf16-appropriate tolerance.
    out_f32 = out.astype(jnp.float32)
    if not jnp.allclose(out_f32, ref, atol=6e-2, rtol=6e-2):
        raise AssertionError(
            f"mismatch, max abs err = {float(jnp.max(jnp.abs(out_f32 - ref)))}")
    print("KERNEL_OK")
</pallas_src>

<mosaic_0001>
module attributes {stable_mosaic.version = 11 : i64} {
  func.func @_conv1_ident_stats_kernel(%arg0: i32, %arg1: memref<9x1x256xf32, #tpu.memory_space<vmem>>, %arg2: memref<1x16x256xbf16, #tpu.memory_space<vmem>>, %arg3: memref<32x144xbf16, #tpu.memory_space<vmem>>, %arg4: memref<1x16x256xbf16, #tpu.memory_space<vmem>>, %arg5: memref<1x16x256xbf16, #tpu.memory_space<vmem>>, %arg6: memref<1x16x1xf32, #tpu.memory_space<vmem>>, %arg7: memref<1x16x1xf32, #tpu.memory_space<vmem>>, %arg8: memref<144x256xbf16, #tpu.memory_space<vmem>>) attributes {dimension_semantics = [#tpu.dimension_semantics<parallel>], iteration_bounds = array<i64: 2>, scalar_prefetch = 0 : i64, scratch_operands = 1 : i64, tpu.core_type = #tpu.core_type<tc>, window_params = [{pipeline_mode = #tpu.pipeline_mode<synchronous>, transform_indices = @transform_0, window_bounds = array<i64: 9, 1, 256>}, {transform_indices = @transform_1, window_bounds = array<i64: 1, 16, 256>}, {pipeline_mode = #tpu.pipeline_mode<synchronous>, transform_indices = @transform_2, window_bounds = array<i64: 32, 144>}, {transform_indices = @transform_3, window_bounds = array<i64: 1, 16, 256>}, {transform_indices = @transform_4, window_bounds = array<i64: 1, 16, 256>}, {transform_indices = @transform_5, window_bounds = array<i64: 1, 16, 1>}, {transform_indices = @transform_6, window_bounds = array<i64: 1, 16, 1>}]} {
    %c0 = arith.constant 0 : index
    %c0_0 = arith.constant 0 : index
    %c0_1 = arith.constant 0 : index
    %0 = vector.load %arg2[%c0, %c0_0, %c0_1] : memref<1x16x256xbf16, #tpu.memory_space<vmem>>, vector<1x16x256xbf16>
    %1 = vector.shape_cast %0 : vector<1x16x256xbf16> to vector<16x256xbf16>
    %2 = arith.extf %1 : vector<16x256xbf16> to vector<16x256xf32>
    %c17_i32 = arith.constant 17 : i32
    %3 = tpu.dynamic_rotate %2 by %c17_i32 dim 1 : vector<16x256xf32>, i32 -> vector<16x256xf32>
    %c0_2 = arith.constant 0 : index
    %c0_3 = arith.constant 0 : index
    %c0_4 = arith.constant 0 : index
    %4 = vector.load %arg1[%c0_2, %c0_3, %c0_4] : memref<9x1x256xf32, #tpu.memory_space<vmem>>, vector<1x1x256xf32>
    %5 = vector.shape_cast %4 : vector<1x1x256xf32> to vector<1x256xf32>
    %6 = vector.broadcast %5 : vector<1x256xf32> to vector<16x256xf32>
    %7 = arith.mulf %3, %6 : vector<16x256xf32>
    %8 = arith.truncf %7 : vector<16x256xf32> to vector<16x256xbf16>
    %c0_5 = arith.constant 0 : index
    %c0_6 = arith.constant 0 : index
    %9 = vector.load %arg8[%c0_5, %c0_6] : memref<144x256xbf16, #tpu.memory_space<vmem>>, vector<16x256xbf16>
    tpu.vector_store %arg8[%c0_5, %c0_6], %8 {strides = array<i32>} : memref<144x256xbf16, #tpu.memory_space<vmem>>, vector<16x256xbf16>,
    %c16_i32 = arith.constant 16 : i32
    %10 = tpu.dynamic_rotate %2 by %c16_i32 dim 1 : vector<16x256xf32>, i32 -> vector<16x256xf32>
    %c1 = arith.constant 1 : index
    %c0_7 = arith.constant 0 : index
    %c0_8 = arith.constant 0 : index
    %11 = vector.load %arg1[%c1, %c0_7, %c0_8] : memref<9x1x256xf32, #tpu.memory_space<vmem>>, vector<1x1x256xf32>
    %12 = vector.shape_cast %11 : vector<1x1x256xf32> to vector<1x256xf32>
    %13 = vector.broadcast %12 : vector<1x256xf32> to vector<16x256xf32>
    %14 = arith.mulf %10, %13 : vector<16x256xf32>
    %15 = arith.truncf %14 : vector<16x256xf32> to vector<16x256xbf16>
    %c16 = arith.constant 16 : index
    %c0_9 = arith.constant 0 : index
    %16 = vector.load %arg8[%c16, %c0_9] : memref<144x256xbf16, #tpu.memory_space<vmem>>, vector<16x256xbf16>
    tpu.vector_store %arg8[%c16, %c0_9], %15 {strides = array<i32>} : memref<144x256xbf16, #tpu.memory_space<vmem>>, vector<16x256xbf16>,
    %c15_i32 = arith.constant 15 : i32
    %17 = tpu.dynamic_rotate %2 by %c15_i32 dim 1 : vector<16x256xf32>, i32 -> vector<16x256xf32>
    %c2 = arith.constant 2 : index
    %c0_10 = arith.constant 0 : index
    %c0_11 = arith.constant 0 : index
    %18 = vector.load %arg1[%c2, %c0_10, %c0_11] : memref<9x1x256xf32, #tpu.memory_space<vmem>>, vector<1x1x256xf32>
    %19 = vector.shape_cast %18 : vector<1x1x256xf32> to vector<1x256xf32>
    %20 = vector.broadcast %19 : vector<1x256xf32> to vector<16x256xf32>
    %21 = arith.mulf %17, %20 : vector<16x256xf32>
    %22 = arith.truncf %21 : vector<16x256xf32> to vector<16x256xbf16>
    %c32 = arith.constant 32 : index
    %c0_12 = arith.constant 0 : index
    %23 = vector.load %arg8[%c32, %c0_12] : memref<144x256xbf16, #tpu.memory_space<vmem>>, vector<16x256xbf16>
    tpu.vector_store %arg8[%c32, %c0_12], %22 {strides = array<i32>} : memref<144x256xbf16, #tpu.memory_space<vmem>>, vector<16x256xbf16>,
    %c1_i32 = arith.constant 1 : i32
    %24 = tpu.dynamic_rotate %2 by %c1_i32 dim 1 : vector<16x256xf32>, i32 -> vector<16x256xf32>
    %c3 = arith.constant 3 : index
    %c0_13 = arith.constant 0 : index
    %c0_14 = arith.constant 0 : index
    %25 = vector.load %arg1[%c3, %c0_13, %c0_14] : memref<9x1x256xf32, #tpu.memory_space<vmem>>, vector<1x1x256xf32>
    %26 = vector.shape_cast %25 : vector<1x1x256xf32> to vector<1x256xf32>
    %27 = vector.broadcast %26 : vector<1x256xf32> to vector<16x256xf32>
    %28 = arith.mulf %24, %27 : vector<16x256xf32>
    %29 = arith.truncf %28 : vector<16x256xf32> to vector<16x256xbf16>
    %c48 = arith.constant 48 : index
    %c0_15 = arith.constant 0 : index
    %30 = vector.load %arg8[%c48, %c0_15] : memref<144x256xbf16, #tpu.memory_space<vmem>>, vector<16x256xbf16>
    tpu.vector_store %arg8[%c48, %c0_15], %29 {strides = array<i32>} : memref<144x256xbf16, #tpu.memory_space<vmem>>, vector<16x256xbf16>,
    %31 = arith.truncf %2 : vector<16x256xf32> to vector<16x256xbf16>
    %c64 = arith.constant 64 : index
    %c0_16 = arith.constant 0 : index
    %32 = vector.load %arg8[%c64, %c0_16] : memref<144x256xbf16, #tpu.memory_space<vmem>>, vector<16x256xbf16>
    tpu.vector_store %arg8[%c64, %c0_16], %31 {strides = array<i32>} : memref<144x256xbf16, #tpu.memory_space<vmem>>, vector<16x256xbf16>,
    %c255_i32 = arith.constant 255 : i32
    %33 = tpu.dynamic_rotate %2 by %c255_i32 dim 1 : vector<16x256xf32>, i32 -> vector<16x256xf32>
    %c5 = arith.constant 5 : index
    %c0_17 = arith.constant 0 : index
    %c0_18 = arith.constant 0 : index
    %34 = vector.load %arg1[%c5, %c0_17, %c0_18] : memref<9x1x256xf32, #tpu.memory_space<vmem>>, vector<1x1x256xf32>
    %35 = vector.shape_cast %34 : vector<1x1x256xf32> to vector<1x256xf32>
    %36 = vector.broadcast %35 : vector<1x256xf32> to vector<16x256xf32>
    %37 = arith.mulf %33, %36 : vector<16x256xf32>
    %38 = arith.truncf %37 : vector<16x256xf32> to vector<16x256xbf16>
    %c80 = arith.constant 80 : index
    %c0_19 = arith.constant 0 : index
    %39 = vector.load %arg8[%c80, %c0_19] : memref<144x256xbf16, #tpu.memory_space<vmem>>, vector<16x256xbf16>
    tpu.vector_store %arg8[%c80, %c0_19], %38 {strides = array<i32>} : memref<144x256xbf16, #tpu.memory_space<vmem>>, vector<16x256xbf16>,
    %c241_i32 = arith.constant 241 : i32
    %40 = tpu.dynamic_rotate %2 by %c241_i32 dim 1 : vector<16x256xf32>, i32 -> vector<16x256xf32>
    %c6 = arith.constant 6 : index
    %c0_20 = arith.constant 0 : index
    %c0_21 = arith.constant 0 : index
    %41 = vector.load %arg1[%c6, %c0_20, %c0_21] : memref<9x1x256xf32, #tpu.memory_space<vmem>>, vector<1x1x256xf32>
    %42 = vector.shape_cast %41 : vector<1x1x256xf32> to vector<1x256xf32>
    %43 = vector.broadcast %42 : vector<1x256xf32> to vector<16x256xf32>
    %44 = arith.mulf %40, %43 : vector<16x256xf32>
    %45 = arith.truncf %44 : vector<16x256xf32> to vector<16x256xbf16>
    %c96 = arith.constant 96 : index
    %c0_22 = arith.constant 0 : index
    %46 = vector.load %arg8[%c96, %c0_22] : memref<144x256xbf16, #tpu.memory_space<vmem>>, vector<16x256xbf16>
    tpu.vector_store %arg8[%c96, %c0_22], %45 {strides = array<i32>} : memref<144x256xbf16, #tpu.memory_space<vmem>>, vector<16x256xbf16>,
    %c240_i32 = arith.constant 240 : i32
    %47 = tpu.dynamic_rotate %2 by %c240_i32 dim 1 : vector<16x256xf32>, i32 -> vector<16x256xf32>
    %c7 = arith.constant 7 : index
    %c0_23 = arith.constant 0 : index
    %c0_24 = arith.constant 0 : index
    %48 = vector.load %arg1[%c7, %c0_23, %c0_24] : memref<9x1x256xf32, #tpu.memory_space<vmem>>, vector<1x1x256xf32>
    %49 = vector.shape_cast %48 : vector<1x1x256xf32> to vector<1x256xf32>
    %50 = vector.broadcast %49 : vector<1x256xf32> to vector<16x256xf32>
    %51 = arith.mulf %47, %50 : vector<16x256xf32>
    %52 = arith.truncf %51 : vector<16x256xf32> to vector<16x256xbf16>
    %c112 = arith.constant 112 : index
    %c0_25 = arith.constant 0 : index
    %53 = vector.load %arg8[%c112, %c0_25] : memref<144x256xbf16, #tpu.memory_space<vmem>>, vector<16x256xbf16>
    tpu.vector_store %arg8[%c112, %c0_25], %52 {strides = array<i32>} : memref<144x256xbf16, #tpu.memory_space<vmem>>, vector<16x256xbf16>,
    %c239_i32 = arith.constant 239 : i32
    %54 = tpu.dynamic_rotate %2 by %c239_i32 dim 1 : vector<16x256xf32>, i32 -> vector<16x256xf32>
    %c8 = arith.constant 8 : index
    %c0_26 = arith.constant 0 : index
    %c0_27 = arith.constant 0 : index
    %55 = vector.load %arg1[%c8, %c0_26, %c0_27] : memref<9x1x256xf32, #tpu.memory_space<vmem>>, vector<1x1x256xf32>
    %56 = vector.shape_cast %55 : vector<1x1x256xf32> to vector<1x256xf32>
    %57 = vector.broadcast %56 : vector<1x256xf32> to vector<16x256xf32>
    %58 = arith.mulf %54, %57 : vector<16x256xf32>
    %59 = arith.truncf %58 : vector<16x256xf32> to vector<16x256xbf16>
    %c128 = arith.constant 128 : index
    %c0_28 = arith.constant 0 : index
    %60 = vector.load %arg8[%c128, %c0_28] : memref<144x256xbf16, #tpu.memory_space<vmem>>, vector<16x256xbf16>
    tpu.vector_store %arg8[%c128, %c0_28], %59 {strides = array<i32>} : memref<144x256xbf16, #tpu.memory_space<vmem>>, vector<16x256xbf16>,
    %c0_29 = arith.constant 0 : index
    %c0_30 = arith.constant 0 : index
    %61 = vector.load %arg3[%c0_29, %c0_30] : memref<32x144xbf16, #tpu.memory_space<vmem>>, vector<32x144xbf16>
    %c0_31 = arith.constant 0 : index
    %c0_32 = arith.constant 0 : index
    %62 = vector.load %arg8[%c0_31, %c0_32] : memref<144x256xbf16, #tpu.memory_space<vmem>>, vector<144x256xbf16>
    %cst = arith.constant dense<0.000000e+00> : vector<32x256xf32>
    %63 = tpu.matmul %61, %62, %cst {dimension_numbers = #tpu.dot_dimension_numbers<[1], [0], [0], [1], [0, 0, 1, 1], [], []>} : vector<32x144xbf16>, vector<144x256xbf16>, vector<32x256xf32> -> vector<32x256xf32>
    %64 = vector.extract_strided_slice %63 {offsets = [0, 0], sizes = [16, 256], strides = [1, 1]} : vector<32x256xf32> to vector<16x256xf32>
    %65 = arith.truncf %64 : vector<16x256xf32> to vector<16x256xbf16>
    %66 = arith.extf %65 : vector<16x256xbf16> to vector<16x256xf32>
    %cst_33 = arith.constant dense<0.000000e+00> : vector<16xf32>
    %67 = vector.multi_reduction <add>, %66, %cst_33 [1] : vector<16x256xf32> to vector<16xf32>
    %68 = vector.shape_cast %67 : vector<16xf32> to vector<16x1xf32>
    %c0_34 = arith.constant 0 : index
    %c0_35 = arith.constant 0 : index
    %c0_36 = arith.constant 0 : index
    %69 = vector.load %arg6[%c0_34, %c0_35, %c0_36] : memref<1x16x1xf32, #tpu.memory_space<vmem>>, vector<1x16x1xf32>
    %70 = vector.shape_cast %69 : vector<1x16x1xf32> to vector<16x1xf32>
    %71 = vector.shape_cast %68 : vector<16x1xf32> to vector<1x16x1xf32>
    tpu.vector_store %arg6[%c0_34, %c0_35, %c0_36], %71 {strides = array<i32>} : memref<1x16x1xf32, #tpu.memory_space<vmem>>, vector<1x16x1xf32>,
    %72 = arith.mulf %66, %66 : vector<16x256xf32>
    %cst_37 = arith.constant dense<0.000000e+00> : vector<16xf32>
    %73 = vector.multi_reduction <add>, %72, %cst_37 [1] : vector<16x256xf32> to vector<16xf32>
    %74 = vector.shape_cast %73 : vector<16xf32> to vector<16x1xf32>
    %c0_38 = arith.constant 0 : index
    %c0_39 = arith.constant 0 : index
    %c0_40 = arith.constant 0 : index
    %75 = vector.load %arg7[%c0_38, %c0_39, %c0_40] : memref<1x16x1xf32, #tpu.memory_space<vmem>>, vector<1x16x1xf32>
    %76 = vector.shape_cast %75 : vector<1x16x1xf32> to vector<16x1xf32>
    %77 = vector.shape_cast %74 : vector<16x1xf32> to vector<1x16x1xf32>
    tpu.vector_store %arg7[%c0_38, %c0_39, %c0_40], %77 {strides = array<i32>} : memref<1x16x1xf32, #tpu.memory_space<vmem>>, vector<1x16x1xf32>,
    %c0_41 = arith.constant 0 : index
    %c0_42 = arith.constant 0 : index
    %c0_43 = arith.constant 0 : index
    %78 = vector.load %arg4[%c0_41, %c0_42, %c0_43] : memref<1x16x256xbf16, #tpu.memory_space<vmem>>, vector<1x16x256xbf16>
    %79 = vector.shape_cast %78 : vector<1x16x256xbf16> to vector<16x256xbf16>
    %80 = vector.shape_cast %65 : vector<16x256xbf16> to vector<1x16x256xbf16>
    tpu.vector_store %arg4[%c0_41, %c0_42, %c0_43], %80 {strides = array<i32>} : memref<1x16x256xbf16, #tpu.memory_space<vmem>>, vector<1x16x256xbf16>,
    %81 = vector.extract_strided_slice %63 {offsets = [16, 0], sizes = [16, 256], strides = [1, 1]} : vector<32x256xf32> to vector<16x256xf32>
    %82 = arith.truncf %81 : vector<16x256xf32> to vector<16x256xbf16>
    %c0_44 = arith.constant 0 : index
    %c0_45 = arith.constant 0 : index
    %c0_46 = arith.constant 0 : index
    %83 = vector.load %arg5[%c0_44, %c0_45, %c0_46] : memref<1x16x256xbf16, #tpu.memory_space<vmem>>, vector<1x16x256xbf16>
    %84 = vector.shape_cast %83 : vector<1x16x256xbf16> to vector<16x256xbf16>
    %85 = vector.shape_cast %82 : vector<16x256xbf16> to vector<1x16x256xbf16>
    tpu.vector_store %arg5[%c0_44, %c0_45, %c0_46], %85 {strides = array<i32>} : memref<1x16x256xbf16, #tpu.memory_space<vmem>>, vector<1x16x256xbf16>,
    return
  }
  func.func @transform_0(%arg0: i32) -> (i32, i32, i32) {
    %c0_i32 = arith.constant 0 : i32
    %c0_i32_0 = arith.constant 0 : i32
    %c0_i32_1 = arith.constant 0 : i32
    %c0_i32_2 = arith.constant 0 : i32
    return %c0_i32, %c0_i32_0, %c0_i32_1 : i32, i32, i32
  }
  func.func @transform_1(%arg0: i32) -> (i32, i32, i32) {
    %c0_i32 = arith.constant 0 : i32
    %c0_i32_0 = arith.constant 0 : i32
    %c0_i32_1 = arith.constant 0 : i32
    return %arg0, %c0_i32, %c0_i32_0 : i32, i32, i32
  }
  func.func @transform_2(%arg0: i32) -> (i32, i32) {
    %c0_i32 = arith.constant 0 : i32
    %c0_i32_0 = arith.constant 0 : i32
    %c0_i32_1 = arith.constant 0 : i32
    return %c0_i32, %c0_i32_0 : i32, i32
  }
  func.func @transform_3(%arg0: i32) -> (i32, i32, i32) {
    %c0_i32 = arith.constant 0 : i32
    %c0_i32_0 = arith.constant 0 : i32
    %c0_i32_1 = arith.constant 0 : i32
    return %arg0, %c0_i32, %c0_i32_0 : i32, i32, i32
  }
  func.func @transform_4(%arg0: i32) -> (i32, i32, i32) {
    %c0_i32 = arith.constant 0 : i32
    %c0_i32_0 = arith.constant 0 : i32
    %c0_i32_1 = arith.constant 0 : i32
    return %arg0, %c0_i32, %c0_i32_0 : i32, i32, i32
  }
  func.func @transform_5(%arg0: i32) -> (i32, i32, i32) {
    %c0_i32 = arith.constant 0 : i32
    %c0_i32_0 = arith.constant 0 : i32
    %c0_i32_1 = arith.constant 0 : i32
    return %arg0, %c0_i32, %c0_i32_0 : i32, i32, i32
  }
  func.func @transform_6(%arg0: i32) -> (i32, i32, i32) {
    %c0_i32 = arith.constant 0 : i32
    %c0_i32_0 = arith.constant 0 : i32
    %c0_i32_1 = arith.constant 0 : i32
    return %arg0, %c0_i32, %c0_i32_0 : i32, i32, i32
  }
}

module attributes {stable_mosaic.version = 11 : i64} {
  func.func @_bn2_residual_kernel(%arg0: i32, %arg1: memref<1x16x256xbf16, #tpu.memory_space<vmem>>, %arg2: memref<1x16x256xbf16, #tpu.memory_space<vmem>>, %arg3: memref<16x1xf32, #tpu.memory_space<vmem>>, %arg4: memref<16x1xf32, #tpu.memory_space<vmem>>, %arg5: memref<16x1xf32, #tpu.memory_space<vmem>>, %arg6: memref<1x16x256xbf16, #tpu.memory_space<vmem>>) attributes {dimension_semantics = [#tpu.dimension_semantics<parallel>], iteration_bounds = array<i64: 2>, scalar_prefetch = 0 : i64, scratch_operands = 0 : i64, tpu.core_type = #tpu.core_type<tc>, window_params = [{transform_indices = @transform_0, window_bounds = array<i64: 1, 16, 256>}, {transform_indices = @transform_1, window_bounds = array<i64: 1, 16, 256>}, {pipeline_mode = #tpu.pipeline_mode<synchronous>, transform_indices = @transform_2, window_bounds = array<i64: 16, 1>}, {pipeline_mode = #tpu.pipeline_mode<synchronous>, transform_indices = @transform_3, window_bounds = array<i64: 16, 1>}, {pipeline_mode = #tpu.pipeline_mode<synchronous>, transform_indices = @transform_4, window_bounds = array<i64: 16, 1>}, {transform_indices = @transform_5, window_bounds = array<i64: 1, 16, 256>}]} {
    %c0 = arith.constant 0 : index
    %c0_0 = arith.constant 0 : index
    %c0_1 = arith.constant 0 : index
    %0 = vector.load %arg1[%c0, %c0_0, %c0_1] : memref<1x16x256xbf16, #tpu.memory_space<vmem>>, vector<1x16x256xbf16>
    %1 = vector.shape_cast %0 : vector<1x16x256xbf16> to vector<16x256xbf16>
    %2 = arith.extf %1 : vector<16x256xbf16> to vector<16x256xf32>
    %c0_2 = arith.constant 0 : index
    %c0_3 = arith.constant 0 : index
    %3 = vector.load %arg3[%c0_2, %c0_3] : memref<16x1xf32, #tpu.memory_space<vmem>>, vector<16x1xf32>
    %4 = vector.broadcast %3 : vector<16x1xf32> to vector<16x256xf32>
    %5 = arith.mulf %2, %4 : vector<16x256xf32>
    %c0_4 = arith.constant 0 : index
    %c0_5 = arith.constant 0 : index
    %6 = vector.load %arg4[%c0_4, %c0_5] : memref<16x1xf32, #tpu.memory_space<vmem>>, vector<16x1xf32>
    %7 = vector.broadcast %6 : vector<16x1xf32> to vector<16x256xf32>
    %8 = arith.addf %5, %7 : vector<16x256xf32>
    %c0_6 = arith.constant 0 : index
    %c0_7 = arith.constant 0 : index
    %c0_8 = arith.constant 0 : index
    %9 = vector.load %arg2[%c0_6, %c0_7, %c0_8] : memref<1x16x256xbf16, #tpu.memory_space<vmem>>, vector<1x16x256xbf16>
    %10 = vector.shape_cast %9 : vector<1x16x256xbf16> to vector<16x256xbf16>
    %11 = arith.extf %10 : vector<16x256xbf16> to vector<16x256xf32>
    %c0_9 = arith.constant 0 : index
    %c0_10 = arith.constant 0 : index
    %12 = vector.load %arg5[%c0_9, %c0_10] : memref<16x1xf32, #tpu.memory_space<vmem>>, vector<16x1xf32>
    %13 = vector.broadcast %12 : vector<16x1xf32> to vector<16x256xf32>
    %14 = arith.addf %11, %13 : vector<16x256xf32>
    %15 = arith.addf %8, %14 : vector<16x256xf32>
    %cst = arith.constant 0.000000e+00 : f32
    %16 = vector.broadcast %cst : f32 to vector<16x256xf32>
    %17 = arith.maximumf %15, %16 : vector<16x256xf32>
    %18 = arith.truncf %17 : vector<16x256xf32> to vector<16x256xbf16>
    %c0_11 = arith.constant 0 : index
    %c0_12 = arith.constant 0 : index
    %c0_13 = arith.constant 0 : index
    %19 = vector.load %arg6[%c0_11, %c0_12, %c0_13] : memref<1x16x256xbf16, #tpu.memory_space<vmem>>, vector<1x16x256xbf16>
    %20 = vector.shape_cast %19 : vector<1x16x256xbf16> to vector<16x256xbf16>
    %21 = vector.shape_cast %18 : vector<16x256xbf16> to vector<1x16x256xbf16>
    tpu.vector_store %arg6[%c0_11, %c0_12, %c0_13], %21 {strides = array<i32>} : memref<1x16x256xbf16, #tpu.memory_space<vmem>>, vector<1x16x256xbf16>,
    return
  }
  func.func @transform_0(%arg0: i32) -> (i32, i32, i32) {
    %c0_i32 = arith.constant 0 : i32
    %c0_i32_0 = arith.constant 0 : i32
    %c0_i32_1 = arith.constant 0 : i32
    return %arg0, %c0_i32, %c0_i32_0 : i32, i32, i32
  }
  func.func @transform_1(%arg0: i32) -> (i32, i32, i32) {
    %c0_i32 = arith.constant 0 : i32
    %c0_i32_0 = arith.constant 0 : i32
    %c0_i32_1 = arith.constant 0 : i32
    return %arg0, %c0_i32, %c0_i32_0 : i32, i32, i32
  }
  func.func @transform_2(%arg0: i32) -> (i32, i32) {
    %c0_i32 = arith.constant 0 : i32
    %c0_i32_0 = arith.constant 0 : i32
    %c0_i32_1 = arith.constant 0 : i32
    return %c0_i32, %c0_i32_0 : i32, i32
  }
  func.func @transform_3(%arg0: i32) -> (i32, i32) {
    %c0_i32 = arith.constant 0 : i32
    %c0_i32_0 = arith.constant 0 : i32
    %c0_i32_1 = arith.constant 0 : i32
    return %c0_i32, %c0_i32_0 : i32, i32
  }
  func.func @transform_4(%arg0: i32) -> (i32, i32) {
    %c0_i32 = arith.constant 0 : i32
    %c0_i32_0 = arith.constant 0 : i32
    %c0_i32_1 = arith.constant 0 : i32
    return %c0_i32, %c0_i32_0 : i32, i32
  }
  func.func @transform_5(%arg0: i32) -> (i32, i32, i32) {
    %c0_i32 = arith.constant 0 : i32
    %c0_i32_0 = arith.constant 0 : i32
    %c0_i32_1 = arith.constant 0 : i32
    return %arg0, %c0_i32, %c0_i32_0 : i32, i32, i32
  }
}

module attributes {stable_mosaic.version = 11 : i64} {
  func.func @_bn1_conv2_stats_kernel(%arg0: i32, %arg1: memref<9x1x256xf32, #tpu.memory_space<vmem>>, %arg2: memref<1x16x256xbf16, #tpu.memory_space<vmem>>, %arg3: memref<16x1xf32, #tpu.memory_space<vmem>>, %arg4: memref<16x1xf32, #tpu.memory_space<vmem>>, %arg5: memref<16x144xbf16, #tpu.memory_space<vmem>>, %arg6: memref<1x16x256xbf16, #tpu.memory_space<vmem>>, %arg7: memref<1x16x1xf32, #tpu.memory_space<vmem>>, %arg8: memref<1x16x1xf32, #tpu.memory_space<vmem>>, %arg9: memref<144x256xbf16, #tpu.memory_space<vmem>>) attributes {dimension_semantics = [#tpu.dimension_semantics<parallel>], iteration_bounds = array<i64: 2>, scalar_prefetch = 0 : i64, scratch_operands = 1 : i64, tpu.core_type = #tpu.core_type<tc>, window_params = [{pipeline_mode = #tpu.pipeline_mode<synchronous>, transform_indices = @transform_0, window_bounds = array<i64: 9, 1, 256>}, {transform_indices = @transform_1, window_bounds = array<i64: 1, 16, 256>}, {pipeline_mode = #tpu.pipeline_mode<synchronous>, transform_indices = @transform_2, window_bounds = array<i64: 16, 1>}, {pipeline_mode = #tpu.pipeline_mode<synchronous>, transform_indices = @transform_3, window_bounds = array<i64: 16, 1>}, {pipeline_mode = #tpu.pipeline_mode<synchronous>, transform_indices = @transform_4, window_bounds = array<i64: 16, 144>}, {transform_indices = @transform_5, window_bounds = array<i64: 1, 16, 256>}, {transform_indices = @transform_6, window_bounds = array<i64: 1, 16, 1>}, {transform_indices = @transform_7, window_bounds = array<i64: 1, 16, 1>}]} {
    %c0 = arith.constant 0 : index
    %c0_0 = arith.constant 0 : index
    %c0_1 = arith.constant 0 : index
    %0 = vector.load %arg2[%c0, %c0_0, %c0_1] : memref<1x16x256xbf16, #tpu.memory_space<vmem>>, vector<1x16x256xbf16>
    %1 = vector.shape_cast %0 : vector<1x16x256xbf16> to vector<16x256xbf16>
    %2 = arith.extf %1 : vector<16x256xbf16> to vector<16x256xf32>
    %c0_2 = arith.constant 0 : index
    %c0_3 = arith.constant 0 : index
    %3 = vector.load %arg3[%c0_2, %c0_3] : memref<16x1xf32, #tpu.memory_space<vmem>>, vector<16x1xf32>
    %4 = vector.broadcast %3 : vector<16x1xf32> to vector<16x256xf32>
    %5 = arith.mulf %2, %4 : vector<16x256xf32>
    %c0_4 = arith.constant 0 : index
    %c0_5 = arith.constant 0 : index
    %6 = vector.load %arg4[%c0_4, %c0_5] : memref<16x1xf32, #tpu.memory_space<vmem>>, vector<16x1xf32>
    %7 = vector.broadcast %6 : vector<16x1xf32> to vector<16x256xf32>
    %8 = arith.addf %5, %7 : vector<16x256xf32>
    %cst = arith.constant 0.000000e+00 : f32
    %9 = vector.broadcast %cst : f32 to vector<16x256xf32>
    %10 = arith.maximumf %8, %9 : vector<16x256xf32>
    %c17_i32 = arith.constant 17 : i32
    %11 = tpu.dynamic_rotate %10 by %c17_i32 dim 1 : vector<16x256xf32>, i32 -> vector<16x256xf32>
    %c0_6 = arith.constant 0 : index
    %c0_7 = arith.constant 0 : index
    %c0_8 = arith.constant 0 : index
    %12 = vector.load %arg1[%c0_6, %c0_7, %c0_8] : memref<9x1x256xf32, #tpu.memory_space<vmem>>, vector<1x1x256xf32>
    %13 = vector.shape_cast %12 : vector<1x1x256xf32> to vector<1x256xf32>
    %14 = vector.broadcast %13 : vector<1x256xf32> to vector<16x256xf32>
    %15 = arith.mulf %11, %14 : vector<16x256xf32>
    %16 = arith.truncf %15 : vector<16x256xf32> to vector<16x256xbf16>
    %c0_9 = arith.constant 0 : index
    %c0_10 = arith.constant 0 : index
    %17 = vector.load %arg9[%c0_9, %c0_10] : memref<144x256xbf16, #tpu.memory_space<vmem>>, vector<16x256xbf16>
    tpu.vector_store %arg9[%c0_9, %c0_10], %16 {strides = array<i32>} : memref<144x256xbf16, #tpu.memory_space<vmem>>, vector<16x256xbf16>,
    %c16_i32 = arith.constant 16 : i32
    %18 = tpu.dynamic_rotate %10 by %c16_i32 dim 1 : vector<16x256xf32>, i32 -> vector<16x256xf32>
    %c1 = arith.constant 1 : index
    %c0_11 = arith.constant 0 : index
    %c0_12 = arith.constant 0 : index
    %19 = vector.load %arg1[%c1, %c0_11, %c0_12] : memref<9x1x256xf32, #tpu.memory_space<vmem>>, vector<1x1x256xf32>
    %20 = vector.shape_cast %19 : vector<1x1x256xf32> to vector<1x256xf32>
    %21 = vector.broadcast %20 : vector<1x256xf32> to vector<16x256xf32>
    %22 = arith.mulf %18, %21 : vector<16x256xf32>
    %23 = arith.truncf %22 : vector<16x256xf32> to vector<16x256xbf16>
    %c16 = arith.constant 16 : index
    %c0_13 = arith.constant 0 : index
    %24 = vector.load %arg9[%c16, %c0_13] : memref<144x256xbf16, #tpu.memory_space<vmem>>, vector<16x256xbf16>
    tpu.vector_store %arg9[%c16, %c0_13], %23 {strides = array<i32>} : memref<144x256xbf16, #tpu.memory_space<vmem>>, vector<16x256xbf16>,
    %c15_i32 = arith.constant 15 : i32
    %25 = tpu.dynamic_rotate %10 by %c15_i32 dim 1 : vector<16x256xf32>, i32 -> vector<16x256xf32>
    %c2 = arith.constant 2 : index
    %c0_14 = arith.constant 0 : index
    %c0_15 = arith.constant 0 : index
    %26 = vector.load %arg1[%c2, %c0_14, %c0_15] : memref<9x1x256xf32, #tpu.memory_space<vmem>>, vector<1x1x256xf32>
    %27 = vector.shape_cast %26 : vector<1x1x256xf32> to vector<1x256xf32>
    %28 = vector.broadcast %27 : vector<1x256xf32> to vector<16x256xf32>
    %29 = arith.mulf %25, %28 : vector<16x256xf32>
    %30 = arith.truncf %29 : vector<16x256xf32> to vector<16x256xbf16>
    %c32 = arith.constant 32 : index
    %c0_16 = arith.constant 0 : index
    %31 = vector.load %arg9[%c32, %c0_16] : memref<144x256xbf16, #tpu.memory_space<vmem>>, vector<16x256xbf16>
    tpu.vector_store %arg9[%c32, %c0_16], %30 {strides = array<i32>} : memref<144x256xbf16, #tpu.memory_space<vmem>>, vector<16x256xbf16>,
    %c1_i32 = arith.constant 1 : i32
    %32 = tpu.dynamic_rotate %10 by %c1_i32 dim 1 : vector<16x256xf32>, i32 -> vector<16x256xf32>
    %c3 = arith.constant 3 : index
    %c0_17 = arith.constant 0 : index
    %c0_18 = arith.constant 0 : index
    %33 = vector.load %arg1[%c3, %c0_17, %c0_18] : memref<9x1x256xf32, #tpu.memory_space<vmem>>, vector<1x1x256xf32>
    %34 = vector.shape_cast %33 : vector<1x1x256xf32> to vector<1x256xf32>
    %35 = vector.broadcast %34 : vector<1x256xf32> to vector<16x256xf32>
    %36 = arith.mulf %32, %35 : vector<16x256xf32>
    %37 = arith.truncf %36 : vector<16x256xf32> to vector<16x256xbf16>
    %c48 = arith.constant 48 : index
    %c0_19 = arith.constant 0 : index
    %38 = vector.load %arg9[%c48, %c0_19] : memref<144x256xbf16, #tpu.memory_space<vmem>>, vector<16x256xbf16>
    tpu.vector_store %arg9[%c48, %c0_19], %37 {strides = array<i32>} : memref<144x256xbf16, #tpu.memory_space<vmem>>, vector<16x256xbf16>,
    %39 = arith.truncf %10 : vector<16x256xf32> to vector<16x256xbf16>
    %c64 = arith.constant 64 : index
    %c0_20 = arith.constant 0 : index
    %40 = vector.load %arg9[%c64, %c0_20] : memref<144x256xbf16, #tpu.memory_space<vmem>>, vector<16x256xbf16>
    tpu.vector_store %arg9[%c64, %c0_20], %39 {strides = array<i32>} : memref<144x256xbf16, #tpu.memory_space<vmem>>, vector<16x256xbf16>,
    %c255_i32 = arith.constant 255 : i32
    %41 = tpu.dynamic_rotate %10 by %c255_i32 dim 1 : vector<16x256xf32>, i32 -> vector<16x256xf32>
    %c5 = arith.constant 5 : index
    %c0_21 = arith.constant 0 : index
    %c0_22 = arith.constant 0 : index
    %42 = vector.load %arg1[%c5, %c0_21, %c0_22] : memref<9x1x256xf32, #tpu.memory_space<vmem>>, vector<1x1x256xf32>
    %43 = vector.shape_cast %42 : vector<1x1x256xf32> to vector<1x256xf32>
    %44 = vector.broadcast %43 : vector<1x256xf32> to vector<16x256xf32>
    %45 = arith.mulf %41, %44 : vector<16x256xf32>
    %46 = arith.truncf %45 : vector<16x256xf32> to vector<16x256xbf16>
    %c80 = arith.constant 80 : index
    %c0_23 = arith.constant 0 : index
    %47 = vector.load %arg9[%c80, %c0_23] : memref<144x256xbf16, #tpu.memory_space<vmem>>, vector<16x256xbf16>
    tpu.vector_store %arg9[%c80, %c0_23], %46 {strides = array<i32>} : memref<144x256xbf16, #tpu.memory_space<vmem>>, vector<16x256xbf16>,
    %c241_i32 = arith.constant 241 : i32
    %48 = tpu.dynamic_rotate %10 by %c241_i32 dim 1 : vector<16x256xf32>, i32 -> vector<16x256xf32>
    %c6 = arith.constant 6 : index
    %c0_24 = arith.constant 0 : index
    %c0_25 = arith.constant 0 : index
    %49 = vector.load %arg1[%c6, %c0_24, %c0_25] : memref<9x1x256xf32, #tpu.memory_space<vmem>>, vector<1x1x256xf32>
    %50 = vector.shape_cast %49 : vector<1x1x256xf32> to vector<1x256xf32>
    %51 = vector.broadcast %50 : vector<1x256xf32> to vector<16x256xf32>
    %52 = arith.mulf %48, %51 : vector<16x256xf32>
    %53 = arith.truncf %52 : vector<16x256xf32> to vector<16x256xbf16>
    %c96 = arith.constant 96 : index
    %c0_26 = arith.constant 0 : index
    %54 = vector.load %arg9[%c96, %c0_26] : memref<144x256xbf16, #tpu.memory_space<vmem>>, vector<16x256xbf16>
    tpu.vector_store %arg9[%c96, %c0_26], %53 {strides = array<i32>} : memref<144x256xbf16, #tpu.memory_space<vmem>>, vector<16x256xbf16>,
    %c240_i32 = arith.constant 240 : i32
    %55 = tpu.dynamic_rotate %10 by %c240_i32 dim 1 : vector<16x256xf32>, i32 -> vector<16x256xf32>
    %c7 = arith.constant 7 : index
    %c0_27 = arith.constant 0 : index
    %c0_28 = arith.constant 0 : index
    %56 = vector.load %arg1[%c7, %c0_27, %c0_28] : memref<9x1x256xf32, #tpu.memory_space<vmem>>, vector<1x1x256xf32>
    %57 = vector.shape_cast %56 : vector<1x1x256xf32> to vector<1x256xf32>
    %58 = vector.broadcast %57 : vector<1x256xf32> to vector<16x256xf32>
    %59 = arith.mulf %55, %58 : vector<16x256xf32>
    %60 = arith.truncf %59 : vector<16x256xf32> to vector<16x256xbf16>
    %c112 = arith.constant 112 : index
    %c0_29 = arith.constant 0 : index
    %61 = vector.load %arg9[%c112, %c0_29] : memref<144x256xbf16, #tpu.memory_space<vmem>>, vector<16x256xbf16>
    tpu.vector_store %arg9[%c112, %c0_29], %60 {strides = array<i32>} : memref<144x256xbf16, #tpu.memory_space<vmem>>, vector<16x256xbf16>,
    %c239_i32 = arith.constant 239 : i32
    %62 = tpu.dynamic_rotate %10 by %c239_i32 dim 1 : vector<16x256xf32>, i32 -> vector<16x256xf32>
    %c8 = arith.constant 8 : index
    %c0_30 = arith.constant 0 : index
    %c0_31 = arith.constant 0 : index
    %63 = vector.load %arg1[%c8, %c0_30, %c0_31] : memref<9x1x256xf32, #tpu.memory_space<vmem>>, vector<1x1x256xf32>
    %64 = vector.shape_cast %63 : vector<1x1x256xf32> to vector<1x256xf32>
    %65 = vector.broadcast %64 : vector<1x256xf32> to vector<16x256xf32>
    %66 = arith.mulf %62, %65 : vector<16x256xf32>
    %67 = arith.truncf %66 : vector<16x256xf32> to vector<16x256xbf16>
    %c128 = arith.constant 128 : index
    %c0_32 = arith.constant 0 : index
    %68 = vector.load %arg9[%c128, %c0_32] : memref<144x256xbf16, #tpu.memory_space<vmem>>, vector<16x256xbf16>
    tpu.vector_store %arg9[%c128, %c0_32], %67 {strides = array<i32>} : memref<144x256xbf16, #tpu.memory_space<vmem>>, vector<16x256xbf16>,
    %c0_33 = arith.constant 0 : index
    %c0_34 = arith.constant 0 : index
    %69 = vector.load %arg5[%c0_33, %c0_34] : memref<16x144xbf16, #tpu.memory_space<vmem>>, vector<16x144xbf16>
    %c0_35 = arith.constant 0 : index
    %c0_36 = arith.constant 0 : index
    %70 = vector.load %arg9[%c0_35, %c0_36] : memref<144x256xbf16, #tpu.memory_space<vmem>>, vector<144x256xbf16>
    %cst_37 = arith.constant dense<0.000000e+00> : vector<16x256xf32>
    %71 = tpu.matmul %69, %70, %cst_37 {dimension_numbers = #tpu.dot_dimension_numbers<[1], [0], [0], [1], [0, 0, 1, 1], [], []>} : vector<16x144xbf16>, vector<144x256xbf16>, vector<16x256xf32> -> vector<16x256xf32>
    %72 = arith.truncf %71 : vector<16x256xf32> to vector<16x256xbf16>
    %73 = arith.extf %72 : vector<16x256xbf16> to vector<16x256xf32>
    %cst_38 = arith.constant dense<0.000000e+00> : vector<16xf32>
    %74 = vector.multi_reduction <add>, %73, %cst_38 [1] : vector<16x256xf32> to vector<16xf32>
    %75 = vector.shape_cast %74 : vector<16xf32> to vector<16x1xf32>
    %c0_39 = arith.constant 0 : index
    %c0_40 = arith.constant 0 : index
    %c0_41 = arith.constant 0 : index
    %76 = vector.load %arg7[%c0_39, %c0_40, %c0_41] : memref<1x16x1xf32, #tpu.memory_space<vmem>>, vector<1x16x1xf32>
    %77 = vector.shape_cast %76 : vector<1x16x1xf32> to vector<16x1xf32>
    %78 = vector.shape_cast %75 : vector<16x1xf32> to vector<1x16x1xf32>
    tpu.vector_store %arg7[%c0_39, %c0_40, %c0_41], %78 {strides = array<i32>} : memref<1x16x1xf32, #tpu.memory_space<vmem>>, vector<1x16x1xf32>,
    %79 = arith.mulf %73, %73 : vector<16x256xf32>
    %cst_42 = arith.constant dense<0.000000e+00> : vector<16xf32>
    %80 = vector.multi_reduction <add>, %79, %cst_42 [1] : vector<16x256xf32> to vector<16xf32>
    %81 = vector.shape_cast %80 : vector<16xf32> to vector<16x1xf32>
    %c0_43 = arith.constant 0 : index
    %c0_44 = arith.constant 0 : index
    %c0_45 = arith.constant 0 : index
    %82 = vector.load %arg8[%c0_43, %c0_44, %c0_45] : memref<1x16x1xf32, #tpu.memory_space<vmem>>, vector<1x16x1xf32>
    %83 = vector.shape_cast %82 : vector<1x16x1xf32> to vector<16x1xf32>
    %84 = vector.shape_cast %81 : vector<16x1xf32> to vector<1x16x1xf32>
    tpu.vector_store %arg8[%c0_43, %c0_44, %c0_45], %84 {strides = array<i32>} : memref<1x16x1xf32, #tpu.memory_space<vmem>>, vector<1x16x1xf32>,
    %c0_46 = arith.constant 0 : index
    %c0_47 = arith.constant 0 : index
    %c0_48 = arith.constant 0 : index
    %85 = vector.load %arg6[%c0_46, %c0_47, %c0_48] : memref<1x16x256xbf16, #tpu.memory_space<vmem>>, vector<1x16x256xbf16>
    %86 = vector.shape_cast %85 : vector<1x16x256xbf16> to vector<16x256xbf16>
    %87 = vector.shape_cast %72 : vector<16x256xbf16> to vector<1x16x256xbf16>
    tpu.vector_store %arg6[%c0_46, %c0_47, %c0_48], %87 {strides = array<i32>} : memref<1x16x256xbf16, #tpu.memory_space<vmem>>, vector<1x16x256xbf16>,
    return
  }
  func.func @transform_0(%arg0: i32) -> (i32, i32, i32) {
    %c0_i32 = arith.constant 0 : i32
    %c0_i32_0 = arith.constant 0 : i32
    %c0_i32_1 = arith.constant 0 : i32
    %c0_i32_2 = arith.constant 0 : i32
    return %c0_i32, %c0_i32_0, %c0_i32_1 : i32, i32, i32
  }
  func.func @transform_1(%arg0: i32) -> (i32, i32, i32) {
    %c0_i32 = arith.constant 0 : i32
    %c0_i32_0 = arith.constant 0 : i32
    %c0_i32_1 = arith.constant 0 : i32
    return %arg0, %c0_i32, %c0_i32_0 : i32, i32, i32
  }
  func.func @transform_2(%arg0: i32) -> (i32, i32) {
    %c0_i32 = arith.constant 0 : i32
    %c0_i32_0 = arith.constant 0 : i32
    %c0_i32_1 = arith.constant 0 : i32
    return %c0_i32, %c0_i32_0 : i32, i32
  }
  func.func @transform_3(%arg0: i32) -> (i32, i32) {
    %c0_i32 = arith.constant 0 : i32
    %c0_i32_0 = arith.constant 0 : i32
    %c0_i32_1 = arith.constant 0 : i32
    return %c0_i32, %c0_i32_0 : i32, i32
  }
  func.func @transform_4(%arg0: i32) -> (i32, i32) {
    %c0_i32 = arith.constant 0 : i32
    %c0_i32_0 = arith.constant 0 : i32
    %c0_i32_1 = arith.constant 0 : i32
    return %c0_i32, %c0_i32_0 : i32, i32
  }
  func.func @transform_5(%arg0: i32) -> (i32, i32, i32) {
    %c0_i32 = arith.constant 0 : i32
    %c0_i32_0 = arith.constant 0 : i32
    %c0_i32_1 = arith.constant 0 : i32
    return %arg0, %c0_i32, %c0_i32_0 : i32, i32, i32
  }
  func.func @transform_6(%arg0: i32) -> (i32, i32, i32) {
    %c0_i32 = arith.constant 0 : i32
    %c0_i32_0 = arith.constant 0 : i32
    %c0_i32_1 = arith.constant 0 : i32
    return %arg0, %c0_i32, %c0_i32_0 : i32, i32, i32
  }
  func.func @transform_7(%arg0: i32) -> (i32, i32, i32) {
    %c0_i32 = arith.constant 0 : i32
    %c0_i32_0 = arith.constant 0 : i32
    %c0_i32_1 = arith.constant 0 : i32
    return %arg0, %c0_i32, %c0_i32_0 : i32, i32, i32
  }
}

</mosaic_0001>

<llo_original>
// kernel: residual_block_forward.5
$region0: #{residual_block_forward.5}
  #allocation0 [shape = 'u32[]', space=smem, size = 0x4, offset = 0x4, fixed_abs, tag = 'smem constant byte address 0x4 - core index']
  #allocation1 [shape = 'u32[72,128]{1,0:T(1,128)}', space=vmem, size = 0x9000, scoped, tag = 'internal scratch']
  %s0 = inlined_call_operand.vmem [shape: bf16[2,16,256], index: 0, kind: input, shape index: {}]
  %s1 = inlined_call_operand.vmem [shape: bf16[2,16,256], index: 1, kind: input, shape index: {}]
  %s2 = inlined_call_operand.vmem [shape: f32[16,1], index: 2, kind: input, shape index: {}]
  %s3 = inlined_call_operand.vmem [shape: f32[16,1], index: 3, kind: input, shape index: {}]
  %s4 = inlined_call_operand.vmem [shape: f32[16,1], index: 4, kind: input, shape index: {}]
  %s5 = inlined_call_operand.vmem [shape: bf16[2,16,256], index: 5, kind: output, shape index: {}]
  %s6 = sld [smem:[#allocation0]]
  $region53: #{residual_block_forward.5} parent=0
    _
  %s8 = ssub.s32 1, %s6
  %s9 = scalar_select 0, %s8, %s6
  loop: start=0, step=1, limit=4
  $region2: #{residual_block_forward.5} parent=0 // loop_pre_header
    _
  $region3: #{residual_block_forward.5} parent=0 // loop_header
    %s11 = sphi 0, %s15
    %p12 = scmp.ge.s32.totalorder %s11, 4
    %s21 = sphi 0, %s23
    %s24 = sphi 0, %s21
    %s25 = sphi 0, %s24
    %s41 = sphi 0, %s25
    %s47 = sphi 0, %s49
    %s50 = sphi 0, %s47
    %s51 = sphi 0, %s50
    %s67 = sphi 0, %s51
    %s71 = sphi 0, %s71
    %s73 = sphi 0, %s71
    %s74 = sphi 0, %s73
    %s88 = sphi 0, %s74
    %s92 = sphi 0, %s92
    %s94 = sphi 0, %s92
    %s95 = sphi 0, %s94
    %s109 = sphi 0, %s95
    %s113 = sphi 0, %s113
    %s115 = sphi 0, %s113
    %s116 = sphi 0, %s115
    %s130 = sphi 0, %s116
    %s136 = sphi 0, %s138
    %s139 = sphi 0, %s136
    %s140 = sphi 0, %s139
    %s156 = sphi 0, %s140
  $region4: #{residual_block_forward.5} parent=0 // loop_header_branch
    %14 = sbr.rel (%p12) target = $region8
  $region5: #{residual_block_forward.5} parent=0 // loop_body
    %s16 = ssub.s32 %s11, 1
    %s17 = ssub.s32 %s11, 2
    %s18 = sadd.s32 %s11, 1
    %s19 = ssub.s32 %s11, %s18
    %p20 = scmp.eq.s32.totalorder %s19, 0
    %s22 = sadd.s32 %s21, 1
    %s23 = scalar_select %p20, %s21, %s22
    %p26 = pneg %p20
    %p27 = scmp.eq.s32.totalorder %s11, 1
    %p28 = por %p26, %p27
    %p29 = scmp.ne.s32.totalorder %s21, %s24
    %p30 = scmp.eq.s32.totalorder %s11, 0
    %p31 = por %p29, %p30
    %p32 = scmp.ne.s32.totalorder %s21, %s24
    %p33 = scmp.eq.s32.totalorder %s16, 1
    %p34 = por %p32, %p33
    %p35 = scmp.ne.s32.totalorder %s24, %s25
    %p36 = scmp.eq.s32.totalorder %s16, 0
    %p37 = por %p35, %p36
    %p38 = scmp.ne.s32.totalorder %s24, %s25
    %p39 = scmp.eq.s32.totalorder %s17, 1
    %p40 = por %p38, %p39
    %p42 = scmp.ne.s32.totalorder %s25, %s41
    %p43 = scmp.eq.s32.totalorder %s17, 0
    %p44 = por %p42, %p43
    %s45 = ssub.s32 %s11, %s18
    %p46 = scmp.eq.s32.totalorder %s45, 0
    %s48 = sadd.s32 %s47, 1
    %s49 = scalar_select %p46, %s47, %s48
    %p52 = pneg %p46
    %p53 = scmp.eq.s32.totalorder %s11, 1
    %p54 = por %p52, %p53
    %p55 = scmp.ne.s32.totalorder %s47, %s50
    %p56 = scmp.eq.s32.totalorder %s11, 0
    %p57 = por %p55, %p56
    %p58 = scmp.ne.s32.totalorder %s47, %s50
    %p59 = scmp.eq.s32.totalorder %s16, 1
    %p60 = por %p58, %p59
    %p61 = scmp.ne.s32.totalorder %s50, %s51
    %p62 = scmp.eq.s32.totalorder %s16, 0
    %p63 = por %p61, %p62
    %p64 = scmp.ne.s32.totalorder %s50, %s51
    %p65 = scmp.eq.s32.totalorder %s17, 1
    %p66 = por %p64, %p65
    %p68 = scmp.ne.s32.totalorder %s51, %s67
    %p69 = scmp.eq.s32.totalorder %s17, 0
    %p70 = por %p68, %p69
    %s72 = sadd.s32 %s71, 1
    %p75 = scmp.eq.s32.totalorder %s11, 1
    %p76 = scmp.ne.s32.totalorder %s71, %s73
    %p77 = scmp.eq.s32.totalorder %s11, 0
    %p78 = por %p76, %p77
    %p79 = scmp.ne.s32.totalorder %s71, %s73
    %p80 = scmp.eq.s32.totalorder %s16, 1
    %p81 = por %p79, %p80
    %p82 = scmp.ne.s32.totalorder %s73, %s74
    %p83 = scmp.eq.s32.totalorder %s16, 0
    %p84 = por %p82, %p83
    %p85 = scmp.ne.s32.totalorder %s73, %s74
    %p86 = scmp.eq.s32.totalorder %s17, 1
    %p87 = por %p85, %p86
    %p89 = scmp.ne.s32.totalorder %s74, %s88
    %p90 = scmp.eq.s32.totalorder %s17, 0
    %p91 = por %p89, %p90
    %s93 = sadd.s32 %s92, 1
    %p96 = scmp.eq.s32.totalorder %s11, 1
    %p97 = scmp.ne.s32.totalorder %s92, %s94
    %p98 = scmp.eq.s32.totalorder %s11, 0
    %p99 = por %p97, %p98
    %p100 = scmp.ne.s32.totalorder %s92, %s94
    %p101 = scmp.eq.s32.totalorder %s16, 1
    %p102 = por %p100, %p101
    %p103 = scmp.ne.s32.totalorder %s94, %s95
    %p104 = scmp.eq.s32.totalorder %s16, 0
    %p105 = por %p103, %p104
    %p106 = scmp.ne.s32.totalorder %s94, %s95
    %p107 = scmp.eq.s32.totalorder %s17, 1
    %p108 = por %p106, %p107
    %p110 = scmp.ne.s32.totalorder %s95, %s109
    %p111 = scmp.eq.s32.totalorder %s17, 0
    %p112 = por %p110, %p111
    %s114 = sadd.s32 %s113, 1
    %p117 = scmp.eq.s32.totalorder %s11, 1
    %p118 = scmp.ne.s32.totalorder %s113, %s115
    %p119 = scmp.eq.s32.totalorder %s11, 0
    %p120 = por %p118, %p119
    %p121 = scmp.ne.s32.totalorder %s113, %s115
    %p122 = scmp.eq.s32.totalorder %s16, 1
    %p123 = por %p121, %p122
    %p124 = scmp.ne.s32.totalorder %s115, %s116
    %p125 = scmp.eq.s32.totalorder %s16, 0
    %p126 = por %p124, %p125
    %p127 = scmp.ne.s32.totalorder %s115, %s116
    %p128 = scmp.eq.s32.totalorder %s17, 1
    %p129 = por %p127, %p128
    %p131 = scmp.ne.s32.totalorder %s116, %s130
    %p132 = scmp.eq.s32.totalorder %s17, 0
    %p133 = por %p131, %p132
    %s134 = ssub.s32 %s11, %s18
    %p135 = scmp.eq.s32.totalorder %s134, 0
    %s137 = sadd.s32 %s136, 1
    %s138 = scalar_select %p135, %s136, %s137
    %p141 = pneg %p135
    %p142 = scmp.eq.s32.totalorder %s11, 1
    %p143 = por %p141, %p142
    %p144 = scmp.ne.s32.totalorder %s136, %s139
    %p145 = scmp.eq.s32.totalorder %s11, 0
    %p146 = por %p144, %p145
    %p147 = scmp.ne.s32.totalorder %s136, %s139
    %p148 = scmp.eq.s32.totalorder %s16, 1
    %p149 = por %p147, %p148
    %p150 = scmp.ne.s32.totalorder %s139, %s140
    %p151 = scmp.eq.s32.totalorder %s16, 0
    %p152 = por %p150, %p151
    %p153 = scmp.ne.s32.totalorder %s139, %s140
    %p154 = scmp.eq.s32.totalorder %s17, 1
    %p155 = por %p153, %p154
    %p157 = scmp.ne.s32.totalorder %s140, %s156
    %p158 = scmp.eq.s32.totalorder %s17, 0
    %p159 = por %p157, %p158
    %p160 = scmp.le.s32.totalorder 1, %s11
    %p161 = scmp.lt.s32.totalorder %s11, 3
    %p162 = pnand %p160, %p161
    %p163 = pneg %p162
    // Predicated region
    $region9: #{residual_block_forward.5} parent=5 // pred_check
      _
    $region10: #{residual_block_forward.5} parent=5 // pred_check_branch
      %165 = sbr.rel (%p162) target = $region12
    $region11: #{residual_block_forward.5} parent=5 // pred_region
      %s166 = ssub.s32 %s11, 1
      // Predicated region
      $region13: #{residual_block_forward.5} parent=11 // pred_check
        %p167 = pneg %p84
      $region14: #{residual_block_forward.5} parent=11 // pred_check_branch
        %169 = sbr.rel (%p167) target = $region16
      $region15: #{residual_block_forward.5} parent=11 // pred_region
        _
      $region16: #{residual_block_forward.5} parent=11 // pred_fallthru
        _
      // Predicated region
      $region17: #{residual_block_forward.5} parent=11 // pred_check
        %p170 = pneg %p105
      $region18: #{residual_block_forward.5} parent=11 // pred_check_branch
        %172 = sbr.rel (%p170) target = $region20
      $region19: #{residual_block_forward.5} parent=11 // pred_region
        _
      $region20: #{residual_block_forward.5} parent=11 // pred_fallthru
        _
      // Predicated region
      $region21: #{residual_block_forward.5} parent=11 // pred_check
        %p173 = pneg %p126
      $region22: #{residual_block_forward.5} parent=11 // pred_check_branch
        %175 = sbr.rel (%p173) target = $region24
      $region23: #{residual_block_forward.5} parent=11 // pred_region
        _
      $region24: #{residual_block_forward.5} parent=11 // pred_fallthru
        _
    $region12: #{residual_block_forward.5} parent=5 // pred_fallthru
      _
    %p176 = scmp.lt.s32.totalorder %s11, 2
    // Predicated region
    $region25: #{residual_block_forward.5} parent=5 // pred_check
      %p177 = pneg %p176
    $region26: #{residual_block_forward.5} parent=5 // pred_check_branch
      %179 = sbr.rel (%p177) target = $region28
    $region27: #{residual_block_forward.5} parent=5 // pred_region
      // Predicated region
      $region29: #{residual_block_forward.5} parent=27 // pred_check
        %p180 = pneg %p31
      $region30: #{residual_block_forward.5} parent=27 // pred_check_branch
        %182 = sbr.rel (%p180) target = $region32
      $region31: #{residual_block_forward.5} parent=27 // pred_region
        %p183 = scmp.lt.s32.totalorder %s11, 1
        %s184 = scalar_select %p183, %s11, 1
        %s185 = smul.addr %s184, 4
        %s186 = smul.addr %s185, 4
        %s187 = scalar_lea.vmem %s0, %s186
      $region32: #{residual_block_forward.5} parent=27 // pred_fallthru
        _
      // Predicated region
      $region33: #{residual_block_forward.5} parent=27 // pred_check
        %p188 = pneg %p57
      $region34: #{residual_block_forward.5} parent=27 // pred_check_branch
        %190 = sbr.rel (%p188) target = $region36
      $region35: #{residual_block_forward.5} parent=27 // pred_region
        %p191 = scmp.lt.s32.totalorder %s11, 1
        %s192 = scalar_select %p191, %s11, 1
        %s193 = smul.addr %s192, 4
        %s194 = smul.addr %s193, 4
        %s195 = scalar_lea.vmem %s1, %s194
      $region36: #{residual_block_forward.5} parent=27 // pred_fallthru
        _
    $region28: #{residual_block_forward.5} parent=5 // pred_fallthru
      _
    %p196 = scmp.le.s32.totalorder 1, %s11
    %p197 = scmp.lt.s32.totalorder %s11, 3
    %p198 = pnand %p196, %p197
    %p199 = pneg %p198
    // Predicated region
    $region37: #{residual_block_forward.5} parent=5 // pred_check
      _
    $region38: #{residual_block_forward.5} parent=5 // pred_check_branch
      %201 = sbr.rel (%p198) target = $region40
    $region39: #{residual_block_forward.5} parent=5 // pred_region
      %s202 = ssub.s32 %s11, 1
      %p203 = scmp.lt.s32.totalorder %s16, 1
      %s204 = scalar_select %p203, %s16, 1
      %s205 = smul.addr %s204, 4
      %s206 = smul.addr %s205, 4
      %s207 = scalar_lea.vmem %s0, %s206
      %p208 = pneg %p37
      %p209 = pneg %p34
      %p210 = scmp.lt.s32.totalorder %s16, 1
      %s211 = scalar_select %p210, %s16, 1
      %s212 = smul.addr %s211, 4
      %s213 = smul.addr %s212, 4
      %s214 = scalar_lea.vmem %s1, %s213
      %p215 = pneg %p63
      %p216 = pneg %p60
      %p217 = pneg %p84
      %p218 = pneg %p81
      %p219 = pneg %p105
      %p220 = pneg %p102
      %p221 = pneg %p126
      %p222 = pneg %p123
      %p223 = pneg %p152
      %p224 = pneg %p149
      %p225 = scmp.lt.s32.totalorder %s16, 1
      %s226 = scalar_select %p225, %s16, 1
      %s227 = smul.addr %s226, 4
      %s228 = smul.addr %s227, 4
      %s229 = scalar_lea.vmem %s5, %s228
      %p230 = scmp.lt.s32.totalorder %s16, 1
      %s231 = scalar_select %p230, %s16, 1
      %s232 = smul.addr %s231, 4
      %s233 = smul.addr %s232, 4
      %s234 = scalar_lea.vmem %s0, %s233
      %p235 = scmp.lt.s32.totalorder %s16, 1
      %s236 = scalar_select %p235, %s16, 1
      %s237 = smul.addr %s236, 4
      %s238 = smul.addr %s237, 4
      %s239 = scalar_lea.vmem %s1, %s238
      %p240 = scmp.lt.s32.totalorder %s16, 1
      %s241 = scalar_select %p240, %s16, 1
      %s242 = smul.addr %s241, 4
      %s243 = smul.addr %s242, 4
      %s244 = scalar_lea.vmem %s5, %s243
      %v245 = vld [vmem:[%s234] sm:$0xff]
      %v246 = vld [vmem:[%s234 + $0x8] sm:$0xff]
      %v247 = vunpack.c.l.bf16 %v245
      %v248 = vunpack.c.h.bf16 %v245
      %v249 = vunpack.c.l.bf16 %v246
      %v250 = vunpack.c.h.bf16 %v246
      %v251 = vld [vmem:[%s2] sm:$0xff]
      %v252 = vld [vmem:[%s2 + $0x8] sm:$0xff]
      %254 = vset.pattern.permute.xlu0 0
      %255 = vperm.xlu0 %254, %v251
      %v256 = vpop.permute.xlu0 %255
      %259 = vset.pattern.permute.xlu0 0
      %260 = vperm.xlu0 %259, %v252
      %v261 = vpop.permute.xlu0 %260
      %v263 = vmul.f32 %v247, %v256
      %v264 = vmul.f32 %v248, %v256
      %v265 = vmul.f32 %v249, %v261
      %v266 = vmul.f32 %v250, %v261
      %v267 = vld [vmem:[%s3] sm:$0xff]
      %v268 = vld [vmem:[%s3 + $0x8] sm:$0xff]
      %270 = vset.pattern.permute.xlu0 0
      %271 = vperm.xlu0 %270, %v267
      %v272 = vpop.permute.xlu0 %271
      %275 = vset.pattern.permute.xlu0 0
      %276 = vperm.xlu0 %275, %v268
      %v277 = vpop.permute.xlu0 %276
      %v279 = vadd.f32 %v263, %v272
      %v280 = vadd.f32 %v264, %v272
      %v281 = vadd.f32 %v265, %v277
      %v282 = vadd.f32 %v266, %v277
      %v283 = vld [vmem:[%s239] sm:$0xff]
      %v284 = vld [vmem:[%s239 + $0x8] sm:$0xff]
      %v285 = vunpack.c.l.bf16 %v283
      %v286 = vunpack.c.h.bf16 %v283
      %v287 = vunpack.c.l.bf16 %v284
      %v288 = vunpack.c.h.bf16 %v284
      %v289 = vld [vmem:[%s4] sm:$0xff]
      %v290 = vld [vmem:[%s4 + $0x8] sm:$0xff]
      %292 = vset.pattern.permute.xlu0 0
      %293 = vperm.xlu0 %292, %v289
      %v294 = vpop.permute.xlu0 %293
      %297 = vset.pattern.permute.xlu0 0
      %298 = vperm.xlu0 %297, %v290
      %v299 = vpop.permute.xlu0 %298
      %v301 = vadd.f32 %v285, %v294
      %v302 = vadd.f32 %v286, %v294
      %v303 = vadd.f32 %v287, %v299
      %v304 = vadd.f32 %v288, %v299
      %v305 = vadd.f32 %v279, %v301
      %v306 = vadd.f32 %v280, %v302
      %v307 = vadd.f32 %v281, %v303
      %v308 = vadd.f32 %v282, %v304
      %v309 = vmax.f32 %v305, 0.0
      %v310 = vmax.f32 %v306, 0.0
      %v311 = vmax.f32 %v307, 0.0
      %v312 = vmax.f32 %v308, 0.0
      %v313 = vpack.c.bf16 %v310, %v309
      %v314 = vpack.c.bf16 %v312, %v311
      %315 = vst [vmem:[%s244] sm:$0xff] %v313
      %316 = vst [vmem:[%s244 + $0x8] sm:$0xff] %v314
      %p317 = scmp.lt.s32.totalorder %s16, 1
      %s318 = scalar_select %p317, %s16, 1
      %s319 = smul.addr %s318, 4
      %s320 = smul.addr %s319, 4
      %s321 = scalar_lea.vmem %s5, %s320
      // Predicated region
      $region41: #{residual_block_forward.5} parent=39 // pred_check
        %p322 = pneg %p149
      $region42: #{residual_block_forward.5} parent=39 // pred_check_branch
        %324 = sbr.rel (%p322) target = $region44
      $region43: #{residual_block_forward.5} parent=39 // pred_region
        _
      $region44: #{residual_block_forward.5} parent=39 // pred_fallthru
        _
    $region40: #{residual_block_forward.5} parent=5 // pred_fallthru
      _
    %p325 = scmp.le.s32.totalorder 2, %s11
    // Predicated region
    $region45: #{residual_block_forward.5} parent=5 // pred_check
      %p326 = pneg %p325
    $region46: #{residual_block_forward.5} parent=5 // pred_check_branch
      %328 = sbr.rel (%p326) target = $region48
    $region47: #{residual_block_forward.5} parent=5 // pred_region
      %s329 = ssub.s32 %s11, 2
      // Predicated region
      $region49: #{residual_block_forward.5} parent=47 // pred_check
        %p330 = pneg %p155
      $region50: #{residual_block_forward.5} parent=47 // pred_check_branch
        %332 = sbr.rel (%p330) target = $region52
      $region51: #{residual_block_forward.5} parent=47 // pred_region
        %p333 = scmp.lt.s32.totalorder %s17, 1
        %s334 = scalar_select %p333, %s17, 1
        %s335 = smul.addr %s334, 4
        %s336 = smul.addr %s335, 4
        %s337 = scalar_lea.vmem %s5, %s336
      $region52: #{residual_block_forward.5} parent=47 // pred_fallthru
        _
    $region48: #{residual_block_forward.5} parent=5 // pred_fallthru
      _
  $region6: #{residual_block_forward.5} parent=0 // loop_footer
    %s15 = sadd.s32 1, %s11
  $region7: #{residual_block_forward.5} parent=0 // loop_footer_branch
    %10 = sbr.rel target = $region3
  $region8: #{residual_block_forward.5} parent=0 // loop_exit
    _

// kernel: residual_block_forward.3
$region0: #{residual_block_forward.3}
  #allocation0 [shape = 'u32[]', space=smem, size = 0x4, offset = 0x4, fixed_abs, tag = 'smem constant byte address 0x4 - core index']
  #allocation1 [shape = 'u32[72,128]{1,0:T(1,128)}', space=vmem, size = 0x9000, scoped, tag = 'internal scratch']
  #allocation2 [shape = 'bf16[144,256]{1,0:T(8,128)(2,1)}', space=vmem, size = 0x12000, scoped, tag = 'scratch operand']
  %s0 = inlined_call_operand.vmem [shape: f32[9,1,256], index: 0, kind: input, shape index: {}]
  %s1 = inlined_call_operand.vmem [shape: bf16[2,16,256], index: 1, kind: input, shape index: {}]
  %s2 = inlined_call_operand.vmem [shape: bf16[32,144], index: 2, kind: input, shape index: {}]
  %s3 = inlined_call_operand.vmem [shape: bf16[2,16,256], index: 3, kind: output, shape index: {0}]
  %s4 = inlined_call_operand.vmem [shape: bf16[2,16,256], index: 4, kind: output, shape index: {1}]
  %s5 = inlined_call_operand.vmem [shape: f32[2,16,1], index: 5, kind: output, shape index: {2}]
  %s6 = inlined_call_operand.vmem [shape: f32[2,16,1], index: 6, kind: output, shape index: {3}]
  %7 = xla_tuple %s3, %s4, %s5, %s6
  %s8 = sld [smem:[#allocation0]]
  $region69: #{residual_block_forward.3} parent=0
    _
  %s10 = ssub.s32 1, %s8
  %s11 = scalar_select 0, %s10, %s8
  loop: start=0, step=1, limit=4
  $region2: #{residual_block_forward.3} parent=0 // loop_pre_header
    _
  $region3: #{residual_block_forward.3} parent=0 // loop_header
    %s13 = sphi 0, %s17
    %p14 = scmp.ge.s32.totalorder %s13, 4
    %s21 = sphi 0, %s21
    %s23 = sphi 0, %s21
    %s24 = sphi 0, %s23
    %s38 = sphi 0, %s24
    %s44 = sphi 0, %s46
    %s47 = sphi 0, %s44
    %s48 = sphi 0, %s47
    %s64 = sphi 0, %s48
    %s68 = sphi 0, %s68
    %s70 = sphi 0, %s68
    %s71 = sphi 0, %s70
    %s85 = sphi 0, %s71
    %s91 = sphi 0, %s93
    %s94 = sphi 0, %s91
    %s95 = sphi 0, %s94
    %s111 = sphi 0, %s95
    %s117 = sphi 0, %s119
    %s120 = sphi 0, %s117
    %s121 = sphi 0, %s120
    %s137 = sphi 0, %s121
    %s143 = sphi 0, %s145
    %s146 = sphi 0, %s143
    %s147 = sphi 0, %s146
    %s163 = sphi 0, %s147
    %s169 = sphi 0, %s171
    %s172 = sphi 0, %s169
    %s173 = sphi 0, %s172
    %s189 = sphi 0, %s173
  $region4: #{residual_block_forward.3} parent=0 // loop_header_branch
    %16 = sbr.rel (%p14) target = $region8
  $region5: #{residual_block_forward.3} parent=0 // loop_body
    %s18 = ssub.s32 %s13, 1
    %s19 = ssub.s32 %s13, 2
    %s20 = sadd.s32 %s13, 1
    %s22 = sadd.s32 %s21, 1
    %p25 = scmp.eq.s32.totalorder %s13, 1
    %p26 = scmp.ne.s32.totalorder %s21, %s23
    %p27 = scmp.eq.s32.totalorder %s13, 0
    %p28 = por %p26, %p27
    %p29 = scmp.ne.s32.totalorder %s21, %s23
    %p30 = scmp.eq.s32.totalorder %s18, 1
    %p31 = por %p29, %p30
    %p32 = scmp.ne.s32.totalorder %s23, %s24
    %p33 = scmp.eq.s32.totalorder %s18, 0
    %p34 = por %p32, %p33
    %p35 = scmp.ne.s32.totalorder %s23, %s24
    %p36 = scmp.eq.s32.totalorder %s19, 1
    %p37 = por %p35, %p36
    %p39 = scmp.ne.s32.totalorder %s24, %s38
    %p40 = scmp.eq.s32.totalorder %s19, 0
    %p41 = por %p39, %p40
    %s42 = ssub.s32 %s13, %s20
    %p43 = scmp.eq.s32.totalorder %s42, 0
    %s45 = sadd.s32 %s44, 1
    %s46 = scalar_select %p43, %s44, %s45
    %p49 = pneg %p43
    %p50 = scmp.eq.s32.totalorder %s13, 1
    %p51 = por %p49, %p50
    %p52 = scmp.ne.s32.totalorder %s44, %s47
    %p53 = scmp.eq.s32.totalorder %s13, 0
    %p54 = por %p52, %p53
    %p55 = scmp.ne.s32.totalorder %s44, %s47
    %p56 = scmp.eq.s32.totalorder %s18, 1
    %p57 = por %p55, %p56
    %p58 = scmp.ne.s32.totalorder %s47, %s48
    %p59 = scmp.eq.s32.totalorder %s18, 0
    %p60 = por %p58, %p59
    %p61 = scmp.ne.s32.totalorder %s47, %s48
    %p62 = scmp.eq.s32.totalorder %s19, 1
    %p63 = por %p61, %p62
    %p65 = scmp.ne.s32.totalorder %s48, %s64
    %p66 = scmp.eq.s32.totalorder %s19, 0
    %p67 = por %p65, %p66
    %s69 = sadd.s32 %s68, 1
    %p72 = scmp.eq.s32.totalorder %s13, 1
    %p73 = scmp.ne.s32.totalorder %s68, %s70
    %p74 = scmp.eq.s32.totalorder %s13, 0
    %p75 = por %p73, %p74
    %p76 = scmp.ne.s32.totalorder %s68, %s70
    %p77 = scmp.eq.s32.totalorder %s18, 1
    %p78 = por %p76, %p77
    %p79 = scmp.ne.s32.totalorder %s70, %s71
    %p80 = scmp.eq.s32.totalorder %s18, 0
    %p81 = por %p79, %p80
    %p82 = scmp.ne.s32.totalorder %s70, %s71
    %p83 = scmp.eq.s32.totalorder %s19, 1
    %p84 = por %p82, %p83
    %p86 = scmp.ne.s32.totalorder %s71, %s85
    %p87 = scmp.eq.s32.totalorder %s19, 0
    %p88 = por %p86, %p87
    %s89 = ssub.s32 %s13, %s20
    %p90 = scmp.eq.s32.totalorder %s89, 0
    %s92 = sadd.s32 %s91, 1
    %s93 = scalar_select %p90, %s91, %s92
    %p96 = pneg %p90
    %p97 = scmp.eq.s32.totalorder %s13, 1
    %p98 = por %p96, %p97
    %p99 = scmp.ne.s32.totalorder %s91, %s94
    %p100 = scmp.eq.s32.totalorder %s13, 0
    %p101 = por %p99, %p100
    %p102 = scmp.ne.s32.totalorder %s91, %s94
    %p103 = scmp.eq.s32.totalorder %s18, 1
    %p104 = por %p102, %p103
    %p105 = scmp.ne.s32.totalorder %s94, %s95
    %p106 = scmp.eq.s32.totalorder %s18, 0
    %p107 = por %p105, %p106
    %p108 = scmp.ne.s32.totalorder %s94, %s95
    %p109 = scmp.eq.s32.totalorder %s19, 1
    %p110 = por %p108, %p109
    %p112 = scmp.ne.s32.totalorder %s95, %s111
    %p113 = scmp.eq.s32.totalorder %s19, 0
    %p114 = por %p112, %p113
    %s115 = ssub.s32 %s13, %s20
    %p116 = scmp.eq.s32.totalorder %s115, 0
    %s118 = sadd.s32 %s117, 1
    %s119 = scalar_select %p116, %s117, %s118
    %p122 = pneg %p116
    %p123 = scmp.eq.s32.totalorder %s13, 1
    %p124 = por %p122, %p123
    %p125 = scmp.ne.s32.totalorder %s117, %s120
    %p126 = scmp.eq.s32.totalorder %s13, 0
    %p127 = por %p125, %p126
    %p128 = scmp.ne.s32.totalorder %s117, %s120
    %p129 = scmp.eq.s32.totalorder %s18, 1
    %p130 = por %p128, %p129
    %p131 = scmp.ne.s32.totalorder %s120, %s121
    %p132 = scmp.eq.s32.totalorder %s18, 0
    %p133 = por %p131, %p132
    %p134 = scmp.ne.s32.totalorder %s120, %s121
    %p135 = scmp.eq.s32.totalorder %s19, 1
    %p136 = por %p134, %p135
    %p138 = scmp.ne.s32.totalorder %s121, %s137
    %p139 = scmp.eq.s32.totalorder %s19, 0
    %p140 = por %p138, %p139
    %s141 = ssub.s32 %s13, %s20
    %p142 = scmp.eq.s32.totalorder %s141, 0
    %s144 = sadd.s32 %s143, 1
    %s145 = scalar_select %p142, %s143, %s144
    %p148 = pneg %p142
    %p149 = scmp.eq.s32.totalorder %s13, 1
    %p150 = por %p148, %p149
    %p151 = scmp.ne.s32.totalorder %s143, %s146
    %p152 = scmp.eq.s32.totalorder %s13, 0
    %p153 = por %p151, %p152
    %p154 = scmp.ne.s32.totalorder %s143, %s146
    %p155 = scmp.eq.s32.totalorder %s18, 1
    %p156 = por %p154, %p155
    %p157 = scmp.ne.s32.totalorder %s146, %s147
    %p158 = scmp.eq.s32.totalorder %s18, 0
    %p159 = por %p157, %p158
    %p160 = scmp.ne.s32.totalorder %s146, %s147
    %p161 = scmp.eq.s32.totalorder %s19, 1
    %p162 = por %p160, %p161
    %p164 = scmp.ne.s32.totalorder %s147, %s163
    %p165 = scmp.eq.s32.totalorder %s19, 0
    %p166 = por %p164, %p165
    %s167 = ssub.s32 %s13, %s20
    %p168 = scmp.eq.s32.totalorder %s167, 0
    %s170 = sadd.s32 %s169, 1
    %s171 = scalar_select %p168, %s169, %s170
    %p174 = pneg %p168
    %p175 = scmp.eq.s32.totalorder %s13, 1
    %p176 = por %p174, %p175
    %p177 = scmp.ne.s32.totalorder %s169, %s172
    %p178 = scmp.eq.s32.totalorder %s13, 0
    %p179 = por %p177, %p178
    %p180 = scmp.ne.s32.totalorder %s169, %s172
    %p181 = scmp.eq.s32.totalorder %s18, 1
    %p182 = por %p180, %p181
    %p183 = scmp.ne.s32.totalorder %s172, %s173
    %p184 = scmp.eq.s32.totalorder %s18, 0
    %p185 = por %p183, %p184
    %p186 = scmp.ne.s32.totalorder %s172, %s173
    %p187 = scmp.eq.s32.totalorder %s19, 1
    %p188 = por %p186, %p187
    %p190 = scmp.ne.s32.totalorder %s173, %s189
    %p191 = scmp.eq.s32.totalorder %s19, 0
    %p192 = por %p190, %p191
    %p193 = scmp.le.s32.totalorder 1, %s13
    %p194 = scmp.lt.s32.totalorder %s13, 3
    %p195 = pnand %p193, %p194
    %p196 = pneg %p195
    // Predicated region
    $region9: #{residual_block_forward.3} parent=5 // pred_check
      _
    $region10: #{residual_block_forward.3} parent=5 // pred_check_branch
      %198 = sbr.rel (%p195) target = $region12
    $region11: #{residual_block_forward.3} parent=5 // pred_region
      %s199 = ssub.s32 %s13, 1
      // Predicated region
      $region13: #{residual_block_forward.3} parent=11 // pred_check
        %p200 = pneg %p34
      $region14: #{residual_block_forward.3} parent=11 // pred_check_branch
        %202 = sbr.rel (%p200) target = $region16
      $region15: #{residual_block_forward.3} parent=11 // pred_region
        _
      $region16: #{residual_block_forward.3} parent=11 // pred_fallthru
        _
      // Predicated region
      $region17: #{residual_block_forward.3} parent=11 // pred_check
        %p203 = pneg %p81
      $region18: #{residual_block_forward.3} parent=11 // pred_check_branch
        %205 = sbr.rel (%p203) target = $region20
      $region19: #{residual_block_forward.3} parent=11 // pred_region
        _
      $region20: #{residual_block_forward.3} parent=11 // pred_fallthru
        _
    $region12: #{residual_block_forward.3} parent=5 // pred_fallthru
      _
    %p206 = scmp.lt.s32.totalorder %s13, 2
    // Predicated region
    $region21: #{residual_block_forward.3} parent=5 // pred_check
      %p207 = pneg %p206
    $region22: #{residual_block_forward.3} parent=5 // pred_check_branch
      %209 = sbr.rel (%p207) target = $region24
    $region23: #{residual_block_forward.3} parent=5 // pred_region
      // Predicated region
      $region25: #{residual_block_forward.3} parent=23 // pred_check
        %p210 = pneg %p54
      $region26: #{residual_block_forward.3} parent=23 // pred_check_branch
        %212 = sbr.rel (%p210) target = $region28
      $region27: #{residual_block_forward.3} parent=23 // pred_region
        %p213 = scmp.lt.s32.totalorder %s13, 1
        %s214 = scalar_select %p213, %s13, 1
        %s215 = smul.addr %s214, 4
        %s216 = smul.addr %s215, 4
        %s217 = scalar_lea.vmem %s1, %s216
      $region28: #{residual_block_forward.3} parent=23 // pred_fallthru
        _
    $region24: #{residual_block_forward.3} parent=5 // pred_fallthru
      _
    %p218 = scmp.le.s32.totalorder 1, %s13
    %p219 = scmp.lt.s32.totalorder %s13, 3
    %p220 = pnand %p218, %p219
    %p221 = pneg %p220
    // Predicated region
    $region29: #{residual_block_forward.3} parent=5 // pred_check
      _
    $region30: #{residual_block_forward.3} parent=5 // pred_check_branch
      %223 = sbr.rel (%p220) target = $region32
    $region31: #{residual_block_forward.3} parent=5 // pred_region
      %s224 = ssub.s32 %s13, 1
      %p225 = pneg %p34
      %p226 = pneg %p31
      %p227 = scmp.lt.s32.totalorder %s18, 1
      %s228 = scalar_select %p227, %s18, 1
      %s229 = smul.addr %s228, 4
      %s230 = smul.addr %s229, 4
      %s231 = scalar_lea.vmem %s1, %s230
      %p232 = pneg %p60
      %p233 = pneg %p57
      %p234 = pneg %p81
      %p235 = pneg %p78
      %p236 = pneg %p107
      %p237 = pneg %p104
      %p238 = scmp.lt.s32.totalorder %s18, 1
      %s239 = scalar_select %p238, %s18, 1
      %s240 = smul.addr %s239, 4
      %s241 = smul.addr %s240, 4
      %s242 = scalar_lea.vmem %s3, %s241
      %p243 = pneg %p133
      %p244 = pneg %p130
      %p245 = scmp.lt.s32.totalorder %s18, 1
      %s246 = scalar_select %p245, %s18, 1
      %s247 = smul.addr %s246, 4
      %s248 = smul.addr %s247, 4
      %s249 = scalar_lea.vmem %s4, %s248
      %p250 = pneg %p159
      %p251 = pneg %p156
      %p252 = scmp.lt.s32.totalorder %s18, 1
      %s253 = scalar_select %p252, %s18, 1
      %s254 = smul.addr %s253, 2
      %s255 = smul.addr %s254, 8
      %s256 = scalar_lea.vmem %s5, %s255
      %p257 = pneg %p185
      %p258 = pneg %p182
      %p259 = scmp.lt.s32.totalorder %s18, 1
      %s260 = scalar_select %p259, %s18, 1
      %s261 = smul.addr %s260, 2
      %s262 = smul.addr %s261, 8
      %s263 = scalar_lea.vmem %s6, %s262
      %p264 = scmp.lt.s32.totalorder %s18, 1
      %s265 = scalar_select %p264, %s18, 1
      %s266 = smul.addr %s265, 4
      %s267 = smul.addr %s266, 4
      %s268 = scalar_lea.vmem %s1, %s267
      %p269 = scmp.lt.s32.totalorder %s18, 1
      %s270 = scalar_select %p269, %s18, 1
      %s271 = smul.addr %s270, 4
      %s272 = smul.addr %s271, 4
      %s273 = scalar_lea.vmem %s3, %s272
      %p274 = scmp.lt.s32.totalorder %s18, 1
      %s275 = scalar_select %p274, %s18, 1
      %s276 = smul.addr %s275, 4
      %s277 = smul.addr %s276, 4
      %s278 = scalar_lea.vmem %s4, %s277
      %p279 = scmp.lt.s32.totalorder %s18, 1
      %s280 = scalar_select %p279, %s18, 1
      %s281 = smul.addr %s280, 2
      %s282 = smul.addr %s281, 8
      %s283 = scalar_lea.vmem %s5, %s282
      %p284 = scmp.lt.s32.totalorder %s18, 1
      %s285 = scalar_select %p284, %s18, 1
      %s286 = smul.addr %s285, 2
      %s287 = smul.addr %s286, 8
      %s288 = scalar_lea.vmem %s6, %s287
      %v290 = vld [vmem:[%s268] sm:$0xff]
      %v291 = vld [vmem:[%s268 + $0x8] sm:$0xff]
      %v292 = vunpack.c.l.bf16 %v290
      %v293 = vunpack.c.h.bf16 %v290
      %v294 = vunpack.c.l.bf16 %v291
      %v295 = vunpack.c.h.bf16 %v291
      %296 = vrot.lane.b32.xlu0 %v292, 17
      %v297 = vpop.permute.xlu0 %296
      %298 = vrot.lane.b32.xlu0 %v294, 17
      %v299 = vpop.permute.xlu0 %298
      %300 = vrot.lane.b32.xlu0 %v293, 17
      %v301 = vpop.permute.xlu0 %300
      %302 = vrot.lane.b32.xlu0 %v295, 17
      %v303 = vpop.permute.xlu0 %302
      %v304 = vlaneseq
      %v305 = vand.u32 %v304, 127
      %vm306 = vcmp.lt.s32.totalorder %v305, 17
      %v307 = vsel %vm306, %v297, %v301
      %v308 = vsel %vm306, %v299, %v303
      %v309 = vsel %vm306, %v301, %v297
      %v310 = vsel %vm306, %v303, %v299
      %v311 = vld [vmem:[%s0] sm:$0x3]
      %v313 = vperm.slane %v311, 0
      %v314 = vperm.slane %v311, 1
      %v317 = vmul.f32 %v309, %v313
      %v318 = vmul.f32 %v307, %v314
      %v319 = vmul.f32 %v310, %v313
      %v320 = vmul.f32 %v308, %v314
      %v321 = vpack.c.bf16 %v318, %v317
      %v322 = vpack.c.bf16 %v320, %v319
      %323 = vst [vmem:[#allocation2] sm:$0xff] %v321
      %324 = vst [vmem:[#allocation2 + $0x8] sm:$0xff] %v322
      %325 = vrot.lane.b32.xlu0 %v292, 16
      %v326 = vpop.permute.xlu0 %325
      %327 = vrot.lane.b32.xlu0 %v294, 16
      %v328 = vpop.permute.xlu0 %327
      %329 = vrot.lane.b32.xlu0 %v293, 16
      %v330 = vpop.permute.xlu0 %329
      %331 = vrot.lane.b32.xlu0 %v295, 16
      %v332 = vpop.permute.xlu0 %331
      %vm333 = vcmp.lt.s32.totalorder %v305, 16
      %v334 = vsel %vm333, %v326, %v330
      %v335 = vsel %vm333, %v328, %v332
      %v336 = vsel %vm333, %v330, %v326
      %v337 = vsel %vm333, %v332, %v328
      %s338 = scalar_lea.vmem %s0, 2
      %v339 = vld [vmem:[%s338] sm:$0x3]
      %v341 = vperm.slane %v339, 0
      %v342 = vperm.slane %v339, 1
      %v345 = vmul.f32 %v336, %v341
      %v346 = vmul.f32 %v334, %v342
      %v347 = vmul.f32 %v337, %v341
      %v348 = vmul.f32 %v335, %v342
      %v349 = vpack.c.bf16 %v346, %v345
      %v350 = vpack.c.bf16 %v348, %v347
      %351 = vst [vmem:[#allocation2 + $0x10] sm:$0xff] %v349
      %352 = vst [vmem:[#allocation2 + $0x18] sm:$0xff] %v350
      %353 = vrot.lane.b32.xlu0 %v292, 15
      %v354 = vpop.permute.xlu0 %353
      %355 = vrot.lane.b32.xlu0 %v294, 15
      %v356 = vpop.permute.xlu0 %355
      %357 = vrot.lane.b32.xlu0 %v293, 15
      %v358 = vpop.permute.xlu0 %357
      %359 = vrot.lane.b32.xlu0 %v295, 15
      %v360 = vpop.permute.xlu0 %359
      %vm361 = vcmp.lt.s32.totalorder %v305, 15
      %v362 = vsel %vm361, %v354, %v358
      %v363 = vsel %vm361, %v356, %v360
      %v364 = vsel %vm361, %v358, %v354
      %v365 = vsel %vm361, %v360, %v356
      %s366 = scalar_lea.vmem %s0, 4
      %v367 = vld [vmem:[%s366] sm:$0x3]
      %v369 = vperm.slane %v367, 0
      %v370 = vperm.slane %v367, 1
      %v373 = vmul.f32 %v364, %v369
      %v374 = vmul.f32 %v362, %v370
      %v375 = vmul.f32 %v365, %v369
      %v376 = vmul.f32 %v363, %v370
      %v377 = vpack.c.bf16 %v374, %v373
      %v378 = vpack.c.bf16 %v376, %v375
      %379 = vst [vmem:[#allocation2 + $0x20] sm:$0xff] %v377
      %380 = vst [vmem:[#allocation2 + $0x28] sm:$0xff] %v378
      %381 = vrot.lane.b32.xlu0 %v292, 1
      %v382 = vpop.permute.xlu0 %381
      %383 = vrot.lane.b32.xlu0 %v294, 1
      %v384 = vpop.permute.xlu0 %383
      %385 = vrot.lane.b32.xlu0 %v293, 1
      %v386 = vpop.permute.xlu0 %385
      %387 = vrot.lane.b32.xlu0 %v295, 1
      %v388 = vpop.permute.xlu0 %387
      %vm389 = vcmp.lt.s32.totalorder %v305, 1
      %v390 = vsel %vm389, %v382, %v386
      %v391 = vsel %vm389, %v384, %v388
      %v392 = vsel %vm389, %v386, %v382
      %v393 = vsel %vm389, %v388, %v384
      %s394 = scalar_lea.vmem %s0, 6
      %v395 = vld [vmem:[%s394] sm:$0x3]
      %v397 = vperm.slane %v395, 0
      %v398 = vperm.slane %v395, 1
      %v401 = vmul.f32 %v392, %v397
      %v402 = vmul.f32 %v390, %v398
      %v403 = vmul.f32 %v393, %v397
      %v404 = vmul.f32 %v391, %v398
      %v405 = vpack.c.bf16 %v402, %v401
      %v406 = vpack.c.bf16 %v404, %v403
      %407 = vst [vmem:[#allocation2 + $0x30] sm:$0xff] %v405
      %408 = vst [vmem:[#allocation2 + $0x38] sm:$0xff] %v406
      %409 = vst [vmem:[#allocation2 + $0x40] sm:$0xff] %v290
      %410 = vst [vmem:[#allocation2 + $0x48] sm:$0xff] %v291
      %411 = vrot.lane.b32.xlu0 %v292, 127
      %v412 = vpop.permute.xlu0 %411
      %413 = vrot.lane.b32.xlu0 %v294, 127
      %v414 = vpop.permute.xlu0 %413
      %415 = vrot.lane.b32.xlu0 %v293, 127
      %v416 = vpop.permute.xlu0 %415
      %417 = vrot.lane.b32.xlu0 %v295, 127
      %v418 = vpop.permute.xlu0 %417
      %vm419 = vcmp.lt.s32.totalorder %v305, 127
      %v420 = vsel %vm419, %v412, %v416
      %v421 = vsel %vm419, %v414, %v418
      %v422 = vsel %vm419, %v416, %v412
      %v423 = vsel %vm419, %v418, %v414
      %s424 = scalar_lea.vmem %s0, 10
      %v425 = vld [vmem:[%s424] sm:$0x3]
      %v427 = vperm.slane %v425, 0
      %v428 = vperm.slane %v425, 1
      %v431 = vmul.f32 %v420, %v427
      %v432 = vmul.f32 %v422, %v428
      %v433 = vmul.f32 %v421, %v427
      %v434 = vmul.f32 %v423, %v428
      %v435 = vpack.c.bf16 %v432, %v431
      %v436 = vpack.c.bf16 %v434, %v433
      %437 = vst [vmem:[#allocation2 + $0x50] sm:$0xff] %v435
      %438 = vst [vmem:[#allocation2 + $0x58] sm:$0xff] %v436
      %439 = vrot.lane.b32.xlu0 %v292, 113
      %v440 = vpop.permute.xlu0 %439
      %441 = vrot.lane.b32.xlu0 %v294, 113
      %v442 = vpop.permute.xlu0 %441
      %443 = vrot.lane.b32.xlu0 %v293, 113
      %v444 = vpop.permute.xlu0 %443
      %445 = vrot.lane.b32.xlu0 %v295, 113
      %v446 = vpop.permute.xlu0 %445
      %vm447 = vcmp.lt.s32.totalorder %v305, 113
      %v448 = vsel %vm447, %v440, %v444
      %v449 = vsel %vm447, %v442, %v446
      %v450 = vsel %vm447, %v444, %v440
      %v451 = vsel %vm447, %v446, %v442
      %s452 = scalar_lea.vmem %s0, 12
      %v453 = vld [vmem:[%s452] sm:$0x3]
      %v455 = vperm.slane %v453, 0
      %v456 = vperm.slane %v453, 1
      %v459 = vmul.f32 %v448, %v455
      %v460 = vmul.f32 %v450, %v456
      %v461 = vmul.f32 %v449, %v455
      %v462 = vmul.f32 %v451, %v456
      %v463 = vpack.c.bf16 %v460, %v459
      %v464 = vpack.c.bf16 %v462, %v461
      %465 = vst [vmem:[#allocation2 + $0x60] sm:$0xff] %v463
      %466 = vst [vmem:[#allocation2 + $0x68] sm:$0xff] %v464
      %467 = vrot.lane.b32.xlu0 %v292, 112
      %v468 = vpop.permute.xlu0 %467
      %469 = vrot.lane.b32.xlu0 %v294, 112
      %v470 = vpop.permute.xlu0 %469
      %471 = vrot.lane.b32.xlu0 %v293, 112
      %v472 = vpop.permute.xlu0 %471
      %473 = vrot.lane.b32.xlu0 %v295, 112
      %v474 = vpop.permute.xlu0 %473
      %vm475 = vcmp.lt.s32.totalorder %v305, 112
      %v476 = vsel %vm475, %v468, %v472
      %v477 = vsel %vm475, %v470, %v474
      %v478 = vsel %vm475, %v472, %v468
      %v479 = vsel %vm475, %v474, %v470
      %s480 = scalar_lea.vmem %s0, 14
      %v481 = vld [vmem:[%s480] sm:$0x3]
      %v483 = vperm.slane %v481, 0
      %v484 = vperm.slane %v481, 1
      %v487 = vmul.f32 %v476, %v483
      %v488 = vmul.f32 %v478, %v484
      %v489 = vmul.f32 %v477, %v483
      %v490 = vmul.f32 %v479, %v484
      %v491 = vpack.c.bf16 %v488, %v487
      %v492 = vpack.c.bf16 %v490, %v489
      %493 = vst [vmem:[#allocation2 + $0x70] sm:$0xff] %v491
      %494 = vst [vmem:[#allocation2 + $0x78] sm:$0xff] %v492
      %495 = vrot.lane.b32.xlu0 %v292, 111
      %v496 = vpop.permute.xlu0 %495
      %497 = vrot.lane.b32.xlu0 %v294, 111
      %v498 = vpop.permute.xlu0 %497
      %499 = vrot.lane.b32.xlu0 %v293, 111
      %v500 = vpop.permute.xlu0 %499
      %501 = vrot.lane.b32.xlu0 %v295, 111
      %v502 = vpop.permute.xlu0 %501
      %vm503 = vcmp.lt.s32.totalorder %v305, 111
      %v504 = vsel %vm503, %v496, %v500
      %v505 = vsel %vm503, %v498, %v502
      %v506 = vsel %vm503, %v500, %v496
      %v507 = vsel %vm503, %v502, %v498
      %s508 = scalar_lea.vmem %s0, 16
      %v509 = vld [vmem:[%s508] sm:$0x3]
      %v511 = vperm.slane %v509, 0
      %v512 = vperm.slane %v509, 1
      %v515 = vmul.f32 %v504, %v511
      %v516 = vmul.f32 %v506, %v512
      %v517 = vmul.f32 %v505, %v511
      %v518 = vmul.f32 %v507, %v512
      %v519 = vpack.c.bf16 %v516, %v515
      %v520 = vpack.c.bf16 %v518, %v517
      %521 = vst [vmem:[#allocation2 + $0x80] sm:$0xff] %v519
      %522 = vst [vmem:[#allocation2 + $0x88] sm:$0xff] %v520
      %v523 = vld [vmem:[%s2] sm:$0xff]
      %v524 = vld [vmem:[%s2 + $0x8] sm:$0xff]
      %v525 = vld [vmem:[%s2 + $0x10] sm:$0xff]
      %v526 = vld [vmem:[%s2 + $0x18] sm:$0xff]
      %v527 = vld [vmem:[#allocation2] sm:$0xff]
      %v528 = vld [vmem:[#allocation2 + $0x8] sm:$0xff]
      %v529 = vld [vmem:[#allocation2 + $0x10] sm:$0xff]
      %v530 = vld [vmem:[#allocation2 + $0x18] sm:$0xff]
      %v531 = vld [vmem:[#allocation2 + $0x20] sm:$0xff]
      %v532 = vld [vmem:[#allocation2 + $0x28] sm:$0xff]
      %v533 = vld [vmem:[#allocation2 + $0x30] sm:$0xff]
      %v534 = vld [vmem:[#allocation2 + $0x38] sm:$0xff]
      %v535 = vld [vmem:[#allocation2 + $0x40] sm:$0xff]
      %v536 = vld [vmem:[#allocation2 + $0x48] sm:$0xff]
      %v537 = vld [vmem:[#allocation2 + $0x50] sm:$0xff]
      %v538 = vld [vmem:[#allocation2 + $0x58] sm:$0xff]
      %v539 = vld [vmem:[#allocation2 + $0x60] sm:$0xff]
      %v540 = vld [vmem:[#allocation2 + $0x68] sm:$0xff]
      %v541 = vld [vmem:[#allocation2 + $0x70] sm:$0xff]
      %v542 = vld [vmem:[#allocation2 + $0x78] sm:$0xff]
      %v543 = vld [vmem:[#allocation2 + $0x80] sm:$0xff]
      %v544 = vld [vmem:[#allocation2 + $0x88] sm:$0xff]
      %v549 = vunpack.c.l.b16 %v523
      %v550 = vunpack.c.h.b16 %v523
      %v551 = vunpack.c.l.b16 %v524
      %v552 = vunpack.c.h.b16 %v524
      %v553 = vunpack.c.l.b16 %v525
      %v554 = vunpack.c.h.b16 %v525
      %v555 = vunpack.c.l.b16 %v526
      %v556 = vunpack.c.h.b16 %v526
      %v557 = vpack.c.b16 %v551, %v549
      %v558 = vpack.c.b16 %v552, %v550
      %v559 = vpack.c.b16 %v555, %v553
      %v560 = vpack.c.b16 %v556, %v554
      %v581 = vunpack.c.l.b16 %v527
      %v582 = vunpack.c.h.b16 %v527
      %v583 = vunpack.c.l.b16 %v528
      %v584 = vunpack.c.h.b16 %v528
      %v585 = vunpack.c.l.b16 %v529
      %v586 = vunpack.c.h.b16 %v529
      %v587 = vunpack.c.l.b16 %v530
      %v588 = vunpack.c.h.b16 %v530
      %v589 = vunpack.c.l.b16 %v531
      %v590 = vunpack.c.h.b16 %v531
      %v591 = vunpack.c.l.b16 %v532
      %v592 = vunpack.c.h.b16 %v532
      %v593 = vunpack.c.l.b16 %v533
      %v594 = vunpack.c.h.b16 %v533
      %v595 = vunpack.c.l.b16 %v534
      %v596 = vunpack.c.h.b16 %v534
      %v597 = vunpack.c.l.b16 %v535
      %v598 = vunpack.c.h.b16 %v535
      %v599 = vunpack.c.l.b16 %v536
      %v600 = vunpack.c.h.b16 %v536
      %v601 = vunpack.c.l.b16 %v537
      %v602 = vunpack.c.h.b16 %v537
      %v603 = vunpack.c.l.b16 %v538
      %v604 = vunpack.c.h.b16 %v538
      %v605 = vunpack.c.l.b16 %v539
      %v606 = vunpack.c.h.b16 %v539
      %v607 = vunpack.c.l.b16 %v540
      %v608 = vunpack.c.h.b16 %v540
      %v609 = vunpack.c.l.b16 %v541
      %v610 = vunpack.c.h.b16 %v541
      %v611 = vunpack.c.l.b16 %v542
      %v612 = vunpack.c.h.b16 %v542
      %v613 = vunpack.c.l.b16 %v543
      %v614 = vunpack.c.h.b16 %v543
      %v615 = vunpack.c.l.b16 %v544
      %v616 = vunpack.c.h.b16 %v544
      %v617 = vpack.c.b16 %v583, %v581
      %v618 = vpack.c.b16 %v584, %v582
      %v619 = vpack.c.b16 %v587, %v585
      %v620 = vpack.c.b16 %v588, %v586
      %v621 = vpack.c.b16 %v591, %v589
      %v622 = vpack.c.b16 %v592, %v590
      %v623 = vpack.c.b16 %v595, %v593
      %v624 = vpack.c.b16 %v596, %v594
      %v625 = vpack.c.b16 %v599, %v597
      %v626 = vpack.c.b16 %v600, %v598
      %v627 = vpack.c.b16 %v603, %v601
      %v628 = vpack.c.b16 %v604, %v602
      %v629 = vpack.c.b16 %v607, %v605
      %v630 = vpack.c.b16 %v608, %v606
      %v631 = vpack.c.b16 %v611, %v609
      %v632 = vpack.c.b16 %v612, %v610
      %v633 = vpack.c.b16 %v615, %v613
      %v634 = vpack.c.b16 %v616, %v614
      %vm653 = vcmask 130048
      %v655 = vsel %vm653, %v558, 0
      %v658 = vsel %vm653, %v560, 0
      %660 = vmatpush.bf16.msra.mxu0 %v631
      %661 = vmatpush.bf16.msra.mxu0 %v629
      %662 = vmatpush.bf16.msra.mxu0 %v627
      %663 = vmatpush.bf16.msra.mxu0 %v625
      %664 = vmatpush.bf16.msra.mxu0 %v623
      %665 = vmatpush.bf16.msra.mxu0 %v621
      %666 = vmatpush.bf16.msra.mxu0 %v619
      %667 = vmatpush.bf16.msra.mxu0 %v617
      %668 = vmatmul.bf16.gmra.mxu0 %v557
      %v669 = vpop.f32.mrf.mxu0
      %v670 = vadd.f32 0.0, %v669
      %v671 = vpop.f32.mrf.mxu0
      %v672 = vadd.f32 0.0, %v671
      %673 = vmatmul.bf16.gmra.mxu0 %v559
      %v674 = vpop.f32.mrf.mxu0
      %v675 = vadd.f32 0.0, %v674
      %v676 = vpop.f32.mrf.mxu0
      %v677 = vadd.f32 0.0, %v676
      %678 = vdwg.mxu0
      %679 = vmatpush.bf16.msra.mxu0 0
      %680 = vmatpush.bf16.msra.mxu0 0
      %681 = vmatpush.bf16.msra.mxu0 0
      %682 = vmatpush.bf16.msra.mxu0 0
      %683 = vmatpush.bf16.msra.mxu0 0
      %684 = vmatpush.bf16.msra.mxu0 0
      %685 = vmatpush.bf16.msra.mxu0 0
      %686 = vmatpush.bf16.msra.mxu0 %v633
      %687 = vmatmul.bf16.gmra.mxu0 %v655
      %v688 = vpop.f32.mrf.mxu0
      %v689 = vadd.f32 %v670, %v688
      %v690 = vpop.f32.mrf.mxu0
      %v691 = vadd.f32 %v672, %v690
      %692 = vmatmul.bf16.gmra.mxu0 %v658
      %v693 = vpop.f32.mrf.mxu0
      %v694 = vadd.f32 %v675, %v693
      %v695 = vpop.f32.mrf.mxu0
      %v696 = vadd.f32 %v677, %v695
      %697 = vdwg.mxu0
      %698 = vmatpush.bf16.msra.mxu0 %v632
      %699 = vmatpush.bf16.msra.mxu0 %v630
      %700 = vmatpush.bf16.msra.mxu0 %v628
      %701 = vmatpush.bf16.msra.mxu0 %v626
      %702 = vmatpush.bf16.msra.mxu0 %v624
      %703 = vmatpush.bf16.msra.mxu0 %v622
      %704 = vmatpush.bf16.msra.mxu0 %v620
      %705 = vmatpush.bf16.msra.mxu0 %v618
      %706 = vmatmul.bf16.gmra.mxu0 %v557
      %v707 = vpop.f32.mrf.mxu0
      %v708 = vadd.f32 0.0, %v707
      %v709 = vpop.f32.mrf.mxu0
      %v710 = vadd.f32 0.0, %v709
      %711 = vmatmul.bf16.gmra.mxu0 %v559
      %v712 = vpop.f32.mrf.mxu0
      %v713 = vadd.f32 0.0, %v712
      %v714 = vpop.f32.mrf.mxu0
      %v715 = vadd.f32 0.0, %v714
      %716 = vdwg.mxu0
      %717 = vmatpush.bf16.msra.mxu0 0
      %718 = vmatpush.bf16.msra.mxu0 0
      %719 = vmatpush.bf16.msra.mxu0 0
      %720 = vmatpush.bf16.msra.mxu0 0
      %721 = vmatpush.bf16.msra.mxu0 0
      %722 = vmatpush.bf16.msra.mxu0 0
      %723 = vmatpush.bf16.msra.mxu0 0
      %724 = vmatpush.bf16.msra.mxu0 %v634
      %725 = vmatmul.bf16.gmra.mxu0 %v655
      %v726 = vpop.f32.mrf.mxu0
      %v727 = vadd.f32 %v708, %v726
      %v728 = vpop.f32.mrf.mxu0
      %v729 = vadd.f32 %v710, %v728
      %730 = vmatmul.bf16.gmra.mxu0 %v658
      %v731 = vpop.f32.mrf.mxu0
      %v732 = vadd.f32 %v713, %v731
      %v733 = vpop.f32.mrf.mxu0
      %v734 = vadd.f32 %v715, %v733
      %735 = vdwg.mxu0
      %v736 = vpack.c.bf16 %v727, %v689
      %v737 = vpack.c.bf16 %v729, %v691
      %v738 = vunpack.c.l.bf16 %v736
      %v739 = vunpack.c.h.bf16 %v736
      %v740 = vunpack.c.l.bf16 %v737
      %v741 = vunpack.c.h.bf16 %v737
      %v742 = vadd.f32 %v738, %v739
      %743 = vadd.xlane.f32.xlu0 %v742
      %v744 = vpop.xlane.xlu0 %743
      %v745 = vadd.f32 %v740, %v741
      %746 = vadd.xlane.f32.xlu0 %v745
      %v747 = vpop.xlane.xlu0 %746
      %vm748 = vcmask 7168
      %749 = vst.msk [vmem:[%s283] sm:$0xff] %vm748, %v744
      %750 = vst.msk [vmem:[%s283 + $0x8] sm:$0xff] %vm748, %v747
      %v751 = vmul.f32 %v738, %v738
      %v752 = vmul.f32 %v739, %v739
      %v753 = vmul.f32 %v740, %v740
      %v754 = vmul.f32 %v741, %v741
      %v755 = vadd.f32 %v751, %v752
      %756 = vadd.xlane.f32.xlu0 %v755
      %v757 = vpop.xlane.xlu0 %756
      %v758 = vadd.f32 %v753, %v754
      %759 = vadd.xlane.f32.xlu0 %v758
      %v760 = vpop.xlane.xlu0 %759
      %761 = vst.msk [vmem:[%s288] sm:$0xff] %vm748, %v757
      %762 = vst.msk [vmem:[%s288 + $0x8] sm:$0xff] %vm748, %v760
      %763 = vst [vmem:[%s273] sm:$0xff] %v736
      %764 = vst [vmem:[%s273 + $0x8] sm:$0xff] %v737
      %v765 = vpack.c.bf16 %v732, %v694
      %v766 = vpack.c.bf16 %v734, %v696
      %767 = vst [vmem:[%s278] sm:$0xff] %v765
      %768 = vst [vmem:[%s278 + $0x8] sm:$0xff] %v766
      %p769 = scmp.lt.s32.totalorder %s18, 1
      %s770 = scalar_select %p769, %s18, 1
      %s771 = smul.addr %s770, 4
      %s772 = smul.addr %s771, 4
      %s773 = scalar_lea.vmem %s3, %s772
      %p774 = scmp.lt.s32.totalorder %s18, 1
      %s775 = scalar_select %p774, %s18, 1
      %s776 = smul.addr %s775, 4
      %s777 = smul.addr %s776, 4
      %s778 = scalar_lea.vmem %s4, %s777
      %p779 = scmp.lt.s32.totalorder %s18, 1
      %s780 = scalar_select %p779, %s18, 1
      %s781 = smul.addr %s780, 2
      %s782 = smul.addr %s781, 8
      %s783 = scalar_lea.vmem %s5, %s782
      %p784 = scmp.lt.s32.totalorder %s18, 1
      %s785 = scalar_select %p784, %s18, 1
      %s786 = smul.addr %s785, 2
      %s787 = smul.addr %s786, 8
      %s788 = scalar_lea.vmem %s6, %s787
      // Predicated region
      $region33: #{residual_block_forward.3} parent=31 // pred_check
        %p789 = pneg %p104
      $region34: #{residual_block_forward.3} parent=31 // pred_check_branch
        %791 = sbr.rel (%p789) target = $region36
      $region35: #{residual_block_forward.3} parent=31 // pred_region
        _
      $region36: #{residual_block_forward.3} parent=31 // pred_fallthru
        _
      // Predicated region
      $region37: #{residual_block_forward.3} parent=31 // pred_check
        %p792 = pneg %p130
      $region38: #{residual_block_forward.3} parent=31 // pred_check_branch
        %794 = sbr.rel (%p792) target = $region40
      $region39: #{residual_block_forward.3} parent=31 // pred_region
        _
      $region40: #{residual_block_forward.3} parent=31 // pred_fallthru
        _
      // Predicated region
      $region41: #{residual_block_forward.3} parent=31 // pred_check
        %p795 = pneg %p156
      $region42: #{residual_block_forward.3} parent=31 // pred_check_branch
        %797 = sbr.rel (%p795) target = $region44
      $region43: #{residual_block_forward.3} parent=31 // pred_region
        _
      $region44: #{residual_block_forward.3} parent=31 // pred_fallthru
        _
      // Predicated region
      $region45: #{residual_block_forward.3} parent=31 // pred_check
        %p798 = pneg %p182
      $region46: #{residual_block_forward.3} parent=31 // pred_check_branch
        %800 = sbr.rel (%p798) target = $region48
      $region47: #{residual_block_forward.3} parent=31 // pred_region
        _
      $region48: #{residual_block_forward.3} parent=31 // pred_fallthru
        _
    $region32: #{residual_block_forward.3} parent=5 // pred_fallthru
      _
    %p801 = scmp.le.s32.totalorder 2, %s13
    // Predicated region
    $region49: #{residual_block_forward.3} parent=5 // pred_check
      %p802 = pneg %p801
    $region50: #{residual_block_forward.3} parent=5 // pred_check_branch
      %804 = sbr.rel (%p802) target = $region52
    $region51: #{residual_block_forward.3} parent=5 // pred_region
      %s805 = ssub.s32 %s13, 2
      // Predicated region
      $region53: #{residual_block_forward.3} parent=51 // pred_check
        %p806 = pneg %p110
      $region54: #{residual_block_forward.3} parent=51 // pred_check_branch
        %808 = sbr.rel (%p806) target = $region56
      $region55: #{residual_block_forward.3} parent=51 // pred_region
        %p809 = scmp.lt.s32.totalorder %s19, 1
        %s810 = scalar_select %p809, %s19, 1
        %s811 = smul.addr %s810, 4
        %s812 = smul.addr %s811, 4
        %s813 = scalar_lea.vmem %s3, %s812
      $region56: #{residual_block_forward.3} parent=51 // pred_fallthru
        _
      // Predicated region
      $region57: #{residual_block_forward.3} parent=51 // pred_check
        %p814 = pneg %p136
      $region58: #{residual_block_forward.3} parent=51 // pred_check_branch
        %816 = sbr.rel (%p814) target = $region60
      $region59: #{residual_block_forward.3} parent=51 // pred_region
        %p817 = scmp.lt.s32.totalorder %s19, 1
        %s818 = scalar_select %p817, %s19, 1
        %s819 = smul.addr %s818, 4
        %s820 = smul.addr %s819, 4
        %s821 = scalar_lea.vmem %s4, %s820
      $region60: #{residual_block_forward.3} parent=51 // pred_fallthru
        _
      // Predicated region
      $region61: #{residual_block_forward.3} parent=51 // pred_check
        %p822 = pneg %p162
      $region62: #{residual_block_forward.3} parent=51 // pred_check_branch
        %824 = sbr.rel (%p822) target = $region64
      $region63: #{residual_block_forward.3} parent=51 // pred_region
        %p825 = scmp.lt.s32.totalorder %s19, 1
        %s826 = scalar_select %p825, %s19, 1
        %s827 = smul.addr %s826, 2
        %s828 = smul.addr %s827, 8
        %s829 = scalar_lea.vmem %s5, %s828
      $region64: #{residual_block_forward.3} parent=51 // pred_fallthru
        _
      // Predicated region
      $region65: #{residual_block_forward.3} parent=51 // pred_check
        %p830 = pneg %p188
      $region66: #{residual_block_forward.3} parent=51 // pred_check_branch
        %832 = sbr.rel (%p830) target = $region68
      $region67: #{residual_block_forward.3} parent=51 // pred_region
        %p833 = scmp.lt.s32.totalorder %s19, 1
        %s834 = scalar_select %p833, %s19, 1
        %s835 = smul.addr %s834, 2
        %s836 = smul.addr %s835, 8
        %s837 = scalar_lea.vmem %s6, %s836
      $region68: #{residual_block_forward.3} parent=51 // pred_fallthru
        _
    $region52: #{residual_block_forward.3} parent=5 // pred_fallthru
      _
  $region6: #{residual_block_forward.3} parent=0 // loop_footer
    %s17 = sadd.s32 1, %s13
  $region7: #{residual_block_forward.3} parent=0 // loop_footer_branch
    %12 = sbr.rel target = $region3
  $region8: #{residual_block_forward.3} parent=0 // loop_exit
    _

// kernel: residual_block_forward.4
$region0: #{residual_block_forward.4}
  #allocation0 [shape = 'u32[]', space=smem, size = 0x4, offset = 0x4, fixed_abs, tag = 'smem constant byte address 0x4 - core index']
  #allocation1 [shape = 'u32[72,128]{1,0:T(1,128)}', space=vmem, size = 0x9000, scoped, tag = 'internal scratch']
  #allocation2 [shape = 'bf16[144,256]{1,0:T(8,128)(2,1)}', space=vmem, size = 0x12000, scoped, tag = 'scratch operand']
  %s0 = inlined_call_operand.vmem [shape: f32[9,1,256], index: 0, kind: input, shape index: {}]
  %s1 = inlined_call_operand.vmem [shape: bf16[2,16,256], index: 1, kind: input, shape index: {}]
  %s2 = inlined_call_operand.vmem [shape: f32[16,1], index: 2, kind: input, shape index: {}]
  %s3 = inlined_call_operand.vmem [shape: f32[16,1], index: 3, kind: input, shape index: {}]
  %s4 = inlined_call_operand.vmem [shape: bf16[16,144], index: 4, kind: input, shape index: {}]
  %s5 = inlined_call_operand.vmem [shape: bf16[2,16,256], index: 5, kind: output, shape index: {0}]
  %s6 = inlined_call_operand.vmem [shape: f32[2,16,1], index: 6, kind: output, shape index: {1}]
  %s7 = inlined_call_operand.vmem [shape: f32[2,16,1], index: 7, kind: output, shape index: {2}]
  %8 = xla_tuple %s5, %s6, %s7
  %s9 = sld [smem:[#allocation0]]
  $region69: #{residual_block_forward.4} parent=0
    _
  %s11 = ssub.s32 1, %s9
  %s12 = scalar_select 0, %s11, %s9
  loop: start=0, step=1, limit=4
  $region2: #{residual_block_forward.4} parent=0 // loop_pre_header
    _
  $region3: #{residual_block_forward.4} parent=0 // loop_header
    %s14 = sphi 0, %s18
    %p15 = scmp.ge.s32.totalorder %s14, 4
    %s22 = sphi 0, %s22
    %s24 = sphi 0, %s22
    %s25 = sphi 0, %s24
    %s39 = sphi 0, %s25
    %s45 = sphi 0, %s47
    %s48 = sphi 0, %s45
    %s49 = sphi 0, %s48
    %s65 = sphi 0, %s49
    %s69 = sphi 0, %s69
    %s71 = sphi 0, %s69
    %s72 = sphi 0, %s71
    %s86 = sphi 0, %s72
    %s90 = sphi 0, %s90
    %s92 = sphi 0, %s90
    %s93 = sphi 0, %s92
    %s107 = sphi 0, %s93
    %s111 = sphi 0, %s111
    %s113 = sphi 0, %s111
    %s114 = sphi 0, %s113
    %s128 = sphi 0, %s114
    %s134 = sphi 0, %s136
    %s137 = sphi 0, %s134
    %s138 = sphi 0, %s137
    %s154 = sphi 0, %s138
    %s160 = sphi 0, %s162
    %s163 = sphi 0, %s160
    %s164 = sphi 0, %s163
    %s180 = sphi 0, %s164
    %s186 = sphi 0, %s188
    %s189 = sphi 0, %s186
    %s190 = sphi 0, %s189
    %s206 = sphi 0, %s190
  $region4: #{residual_block_forward.4} parent=0 // loop_header_branch
    %17 = sbr.rel (%p15) target = $region8
  $region5: #{residual_block_forward.4} parent=0 // loop_body
    %s19 = ssub.s32 %s14, 1
    %s20 = ssub.s32 %s14, 2
    %s21 = sadd.s32 %s14, 1
    %s23 = sadd.s32 %s22, 1
    %p26 = scmp.eq.s32.totalorder %s14, 1
    %p27 = scmp.ne.s32.totalorder %s22, %s24
    %p28 = scmp.eq.s32.totalorder %s14, 0
    %p29 = por %p27, %p28
    %p30 = scmp.ne.s32.totalorder %s22, %s24
    %p31 = scmp.eq.s32.totalorder %s19, 1
    %p32 = por %p30, %p31
    %p33 = scmp.ne.s32.totalorder %s24, %s25
    %p34 = scmp.eq.s32.totalorder %s19, 0
    %p35 = por %p33, %p34
    %p36 = scmp.ne.s32.totalorder %s24, %s25
    %p37 = scmp.eq.s32.totalorder %s20, 1
    %p38 = por %p36, %p37
    %p40 = scmp.ne.s32.totalorder %s25, %s39
    %p41 = scmp.eq.s32.totalorder %s20, 0
    %p42 = por %p40, %p41
    %s43 = ssub.s32 %s14, %s21
    %p44 = scmp.eq.s32.totalorder %s43, 0
    %s46 = sadd.s32 %s45, 1
    %s47 = scalar_select %p44, %s45, %s46
    %p50 = pneg %p44
    %p51 = scmp.eq.s32.totalorder %s14, 1
    %p52 = por %p50, %p51
    %p53 = scmp.ne.s32.totalorder %s45, %s48
    %p54 = scmp.eq.s32.totalorder %s14, 0
    %p55 = por %p53, %p54
    %p56 = scmp.ne.s32.totalorder %s45, %s48
    %p57 = scmp.eq.s32.totalorder %s19, 1
    %p58 = por %p56, %p57
    %p59 = scmp.ne.s32.totalorder %s48, %s49
    %p60 = scmp.eq.s32.totalorder %s19, 0
    %p61 = por %p59, %p60
    %p62 = scmp.ne.s32.totalorder %s48, %s49
    %p63 = scmp.eq.s32.totalorder %s20, 1
    %p64 = por %p62, %p63
    %p66 = scmp.ne.s32.totalorder %s49, %s65
    %p67 = scmp.eq.s32.totalorder %s20, 0
    %p68 = por %p66, %p67
    %s70 = sadd.s32 %s69, 1
    %p73 = scmp.eq.s32.totalorder %s14, 1
    %p74 = scmp.ne.s32.totalorder %s69, %s71
    %p75 = scmp.eq.s32.totalorder %s14, 0
    %p76 = por %p74, %p75
    %p77 = scmp.ne.s32.totalorder %s69, %s71
    %p78 = scmp.eq.s32.totalorder %s19, 1
    %p79 = por %p77, %p78
    %p80 = scmp.ne.s32.totalorder %s71, %s72
    %p81 = scmp.eq.s32.totalorder %s19, 0
    %p82 = por %p80, %p81
    %p83 = scmp.ne.s32.totalorder %s71, %s72
    %p84 = scmp.eq.s32.totalorder %s20, 1
    %p85 = por %p83, %p84
    %p87 = scmp.ne.s32.totalorder %s72, %s86
    %p88 = scmp.eq.s32.totalorder %s20, 0
    %p89 = por %p87, %p88
    %s91 = sadd.s32 %s90, 1
    %p94 = scmp.eq.s32.totalorder %s14, 1
    %p95 = scmp.ne.s32.totalorder %s90, %s92
    %p96 = scmp.eq.s32.totalorder %s14, 0
    %p97 = por %p95, %p96
    %p98 = scmp.ne.s32.totalorder %s90, %s92
    %p99 = scmp.eq.s32.totalorder %s19, 1
    %p100 = por %p98, %p99
    %p101 = scmp.ne.s32.totalorder %s92, %s93
    %p102 = scmp.eq.s32.totalorder %s19, 0
    %p103 = por %p101, %p102
    %p104 = scmp.ne.s32.totalorder %s92, %s93
    %p105 = scmp.eq.s32.totalorder %s20, 1
    %p106 = por %p104, %p105
    %p108 = scmp.ne.s32.totalorder %s93, %s107
    %p109 = scmp.eq.s32.totalorder %s20, 0
    %p110 = por %p108, %p109
    %s112 = sadd.s32 %s111, 1
    %p115 = scmp.eq.s32.totalorder %s14, 1
    %p116 = scmp.ne.s32.totalorder %s111, %s113
    %p117 = scmp.eq.s32.totalorder %s14, 0
    %p118 = por %p116, %p117
    %p119 = scmp.ne.s32.totalorder %s111, %s113
    %p120 = scmp.eq.s32.totalorder %s19, 1
    %p121 = por %p119, %p120
    %p122 = scmp.ne.s32.totalorder %s113, %s114
    %p123 = scmp.eq.s32.totalorder %s19, 0
    %p124 = por %p122, %p123
    %p125 = scmp.ne.s32.totalorder %s113, %s114
    %p126 = scmp.eq.s32.totalorder %s20, 1
    %p127 = por %p125, %p126
    %p129 = scmp.ne.s32.totalorder %s114, %s128
    %p130 = scmp.eq.s32.totalorder %s20, 0
    %p131 = por %p129, %p130
    %s132 = ssub.s32 %s14, %s21
    %p133 = scmp.eq.s32.totalorder %s132, 0
    %s135 = sadd.s32 %s134, 1
    %s136 = scalar_select %p133, %s134, %s135
    %p139 = pneg %p133
    %p140 = scmp.eq.s32.totalorder %s14, 1
    %p141 = por %p139, %p140
    %p142 = scmp.ne.s32.totalorder %s134, %s137
    %p143 = scmp.eq.s32.totalorder %s14, 0
    %p144 = por %p142, %p143
    %p145 = scmp.ne.s32.totalorder %s134, %s137
    %p146 = scmp.eq.s32.totalorder %s19, 1
    %p147 = por %p145, %p146
    %p148 = scmp.ne.s32.totalorder %s137, %s138
    %p149 = scmp.eq.s32.totalorder %s19, 0
    %p150 = por %p148, %p149
    %p151 = scmp.ne.s32.totalorder %s137, %s138
    %p152 = scmp.eq.s32.totalorder %s20, 1
    %p153 = por %p151, %p152
    %p155 = scmp.ne.s32.totalorder %s138, %s154
    %p156 = scmp.eq.s32.totalorder %s20, 0
    %p157 = por %p155, %p156
    %s158 = ssub.s32 %s14, %s21
    %p159 = scmp.eq.s32.totalorder %s158, 0
    %s161 = sadd.s32 %s160, 1
    %s162 = scalar_select %p159, %s160, %s161
    %p165 = pneg %p159
    %p166 = scmp.eq.s32.totalorder %s14, 1
    %p167 = por %p165, %p166
    %p168 = scmp.ne.s32.totalorder %s160, %s163
    %p169 = scmp.eq.s32.totalorder %s14, 0
    %p170 = por %p168, %p169
    %p171 = scmp.ne.s32.totalorder %s160, %s163
    %p172 = scmp.eq.s32.totalorder %s19, 1
    %p173 = por %p171, %p172
    %p174 = scmp.ne.s32.totalorder %s163, %s164
    %p175 = scmp.eq.s32.totalorder %s19, 0
    %p176 = por %p174, %p175
    %p177 = scmp.ne.s32.totalorder %s163, %s164
    %p178 = scmp.eq.s32.totalorder %s20, 1
    %p179 = por %p177, %p178
    %p181 = scmp.ne.s32.totalorder %s164, %s180
    %p182 = scmp.eq.s32.totalorder %s20, 0
    %p183 = por %p181, %p182
    %s184 = ssub.s32 %s14, %s21
    %p185 = scmp.eq.s32.totalorder %s184, 0
    %s187 = sadd.s32 %s186, 1
    %s188 = scalar_select %p185, %s186, %s187
    %p191 = pneg %p185
    %p192 = scmp.eq.s32.totalorder %s14, 1
    %p193 = por %p191, %p192
    %p194 = scmp.ne.s32.totalorder %s186, %s189
    %p195 = scmp.eq.s32.totalorder %s14, 0
    %p196 = por %p194, %p195
    %p197 = scmp.ne.s32.totalorder %s186, %s189
    %p198 = scmp.eq.s32.totalorder %s19, 1
    %p199 = por %p197, %p198
    %p200 = scmp.ne.s32.totalorder %s189, %s190
    %p201 = scmp.eq.s32.totalorder %s19, 0
    %p202 = por %p200, %p201
    %p203 = scmp.ne.s32.totalorder %s189, %s190
    %p204 = scmp.eq.s32.totalorder %s20, 1
    %p205 = por %p203, %p204
    %p207 = scmp.ne.s32.totalorder %s190, %s206
    %p208 = scmp.eq.s32.totalorder %s20, 0
    %p209 = por %p207, %p208
    %p210 = scmp.le.s32.totalorder 1, %s14
    %p211 = scmp.lt.s32.totalorder %s14, 3
    %p212 = pnand %p210, %p211
    %p213 = pneg %p212
    // Predicated region
    $region9: #{residual_block_forward.4} parent=5 // pred_check
      _
    $region10: #{residual_block_forward.4} parent=5 // pred_check_branch
      %215 = sbr.rel (%p212) target = $region12
    $region11: #{residual_block_forward.4} parent=5 // pred_region
      %s216 = ssub.s32 %s14, 1
      // Predicated region
      $region13: #{residual_block_forward.4} parent=11 // pred_check
        %p217 = pneg %p35
      $region14: #{residual_block_forward.4} parent=11 // pred_check_branch
        %219 = sbr.rel (%p217) target = $region16
      $region15: #{residual_block_forward.4} parent=11 // pred_region
        _
      $region16: #{residual_block_forward.4} parent=11 // pred_fallthru
        _
      // Predicated region
      $region17: #{residual_block_forward.4} parent=11 // pred_check
        %p220 = pneg %p82
      $region18: #{residual_block_forward.4} parent=11 // pred_check_branch
        %222 = sbr.rel (%p220) target = $region20
      $region19: #{residual_block_forward.4} parent=11 // pred_region
        _
      $region20: #{residual_block_forward.4} parent=11 // pred_fallthru
        _
      // Predicated region
      $region21: #{residual_block_forward.4} parent=11 // pred_check
        %p223 = pneg %p103
      $region22: #{residual_block_forward.4} parent=11 // pred_check_branch
        %225 = sbr.rel (%p223) target = $region24
      $region23: #{residual_block_forward.4} parent=11 // pred_region
        _
      $region24: #{residual_block_forward.4} parent=11 // pred_fallthru
        _
      // Predicated region
      $region25: #{residual_block_forward.4} parent=11 // pred_check
        %p226 = pneg %p124
      $region26: #{residual_block_forward.4} parent=11 // pred_check_branch
        %228 = sbr.rel (%p226) target = $region28
      $region27: #{residual_block_forward.4} parent=11 // pred_region
        _
      $region28: #{residual_block_forward.4} parent=11 // pred_fallthru
        _
    $region12: #{residual_block_forward.4} parent=5 // pred_fallthru
      _
    %p229 = scmp.lt.s32.totalorder %s14, 2
    // Predicated region
    $region29: #{residual_block_forward.4} parent=5 // pred_check
      %p230 = pneg %p229
    $region30: #{residual_block_forward.4} parent=5 // pred_check_branch
      %232 = sbr.rel (%p230) target = $region32
    $region31: #{residual_block_forward.4} parent=5 // pred_region
      // Predicated region
      $region33: #{residual_block_forward.4} parent=31 // pred_check
        %p233 = pneg %p55
      $region34: #{residual_block_forward.4} parent=31 // pred_check_branch
        %235 = sbr.rel (%p233) target = $region36
      $region35: #{residual_block_forward.4} parent=31 // pred_region
        %p236 = scmp.lt.s32.totalorder %s14, 1
        %s237 = scalar_select %p236, %s14, 1
        %s238 = smul.addr %s237, 4
        %s239 = smul.addr %s238, 4
        %s240 = scalar_lea.vmem %s1, %s239
      $region36: #{residual_block_forward.4} parent=31 // pred_fallthru
        _
    $region32: #{residual_block_forward.4} parent=5 // pred_fallthru
      _
    %p241 = scmp.le.s32.totalorder 1, %s14
    %p242 = scmp.lt.s32.totalorder %s14, 3
    %p243 = pnand %p241, %p242
    %p244 = pneg %p243
    // Predicated region
    $region37: #{residual_block_forward.4} parent=5 // pred_check
      _
    $region38: #{residual_block_forward.4} parent=5 // pred_check_branch
      %246 = sbr.rel (%p243) target = $region40
    $region39: #{residual_block_forward.4} parent=5 // pred_region
      %s247 = ssub.s32 %s14, 1
      %p248 = pneg %p35
      %p249 = pneg %p32
      %p250 = scmp.lt.s32.totalorder %s19, 1
      %s251 = scalar_select %p250, %s19, 1
      %s252 = smul.addr %s251, 4
      %s253 = smul.addr %s252, 4
      %s254 = scalar_lea.vmem %s1, %s253
      %p255 = pneg %p61
      %p256 = pneg %p58
      %p257 = pneg %p82
      %p258 = pneg %p79
      %p259 = pneg %p103
      %p260 = pneg %p100
      %p261 = pneg %p124
      %p262 = pneg %p121
      %p263 = pneg %p150
      %p264 = pneg %p147
      %p265 = scmp.lt.s32.totalorder %s19, 1
      %s266 = scalar_select %p265, %s19, 1
      %s267 = smul.addr %s266, 4
      %s268 = smul.addr %s267, 4
      %s269 = scalar_lea.vmem %s5, %s268
      %p270 = pneg %p176
      %p271 = pneg %p173
      %p272 = scmp.lt.s32.totalorder %s19, 1
      %s273 = scalar_select %p272, %s19, 1
      %s274 = smul.addr %s273, 2
      %s275 = smul.addr %s274, 8
      %s276 = scalar_lea.vmem %s6, %s275
      %p277 = pneg %p202
      %p278 = pneg %p199
      %p279 = scmp.lt.s32.totalorder %s19, 1
      %s280 = scalar_select %p279, %s19, 1
      %s281 = smul.addr %s280, 2
      %s282 = smul.addr %s281, 8
      %s283 = scalar_lea.vmem %s7, %s282
      %p284 = scmp.lt.s32.totalorder %s19, 1
      %s285 = scalar_select %p284, %s19, 1
      %s286 = smul.addr %s285, 4
      %s287 = smul.addr %s286, 4
      %s288 = scalar_lea.vmem %s1, %s287
      %p289 = scmp.lt.s32.totalorder %s19, 1
      %s290 = scalar_select %p289, %s19, 1
      %s291 = smul.addr %s290, 4
      %s292 = smul.addr %s291, 4
      %s293 = scalar_lea.vmem %s5, %s292
      %p294 = scmp.lt.s32.totalorder %s19, 1
      %s295 = scalar_select %p294, %s19, 1
      %s296 = smul.addr %s295, 2
      %s297 = smul.addr %s296, 8
      %s298 = scalar_lea.vmem %s6, %s297
      %p299 = scmp.lt.s32.totalorder %s19, 1
      %s300 = scalar_select %p299, %s19, 1
      %s301 = smul.addr %s300, 2
      %s302 = smul.addr %s301, 8
      %s303 = scalar_lea.vmem %s7, %s302
      %v305 = vld [vmem:[%s288] sm:$0xff]
      %v306 = vld [vmem:[%s288 + $0x8] sm:$0xff]
      %v307 = vunpack.c.l.bf16 %v305
      %v308 = vunpack.c.h.bf16 %v305
      %v309 = vunpack.c.l.bf16 %v306
      %v310 = vunpack.c.h.bf16 %v306
      %v311 = vld [vmem:[%s2] sm:$0xff]
      %v312 = vld [vmem:[%s2 + $0x8] sm:$0xff]
      %314 = vset.pattern.permute.xlu0 0
      %315 = vperm.xlu0 %314, %v311
      %v316 = vpop.permute.xlu0 %315
      %319 = vset.pattern.permute.xlu0 0
      %320 = vperm.xlu0 %319, %v312
      %v321 = vpop.permute.xlu0 %320
      %v323 = vmul.f32 %v307, %v316
      %v324 = vmul.f32 %v308, %v316
      %v325 = vmul.f32 %v309, %v321
      %v326 = vmul.f32 %v310, %v321
      %v327 = vld [vmem:[%s3] sm:$0xff]
      %v328 = vld [vmem:[%s3 + $0x8] sm:$0xff]
      %330 = vset.pattern.permute.xlu0 0
      %331 = vperm.xlu0 %330, %v327
      %v332 = vpop.permute.xlu0 %331
      %335 = vset.pattern.permute.xlu0 0
      %336 = vperm.xlu0 %335, %v328
      %v337 = vpop.permute.xlu0 %336
      %v339 = vadd.f32 %v323, %v332
      %v340 = vadd.f32 %v324, %v332
      %v341 = vadd.f32 %v325, %v337
      %v342 = vadd.f32 %v326, %v337
      %v343 = vmax.f32 %v339, 0.0
      %v344 = vmax.f32 %v340, 0.0
      %v345 = vmax.f32 %v341, 0.0
      %v346 = vmax.f32 %v342, 0.0
      %347 = vrot.lane.b32.xlu0 %v343, 17
      %v348 = vpop.permute.xlu0 %347
      %349 = vrot.lane.b32.xlu0 %v345, 17
      %v350 = vpop.permute.xlu0 %349
      %351 = vrot.lane.b32.xlu0 %v344, 17
      %v352 = vpop.permute.xlu0 %351
      %353 = vrot.lane.b32.xlu0 %v346, 17
      %v354 = vpop.permute.xlu0 %353
      %v355 = vlaneseq
      %v356 = vand.u32 %v355, 127
      %vm357 = vcmp.lt.s32.totalorder %v356, 17
      %v358 = vsel %vm357, %v348, %v352
      %v359 = vsel %vm357, %v350, %v354
      %v360 = vsel %vm357, %v352, %v348
      %v361 = vsel %vm357, %v354, %v350
      %v362 = vld [vmem:[%s0] sm:$0x3]
      %v364 = vperm.slane %v362, 0
      %v365 = vperm.slane %v362, 1
      %v368 = vmul.f32 %v360, %v364
      %v369 = vmul.f32 %v358, %v365
      %v370 = vmul.f32 %v361, %v364
      %v371 = vmul.f32 %v359, %v365
      %v372 = vpack.c.bf16 %v369, %v368
      %v373 = vpack.c.bf16 %v371, %v370
      %374 = vst [vmem:[#allocation2] sm:$0xff] %v372
      %375 = vst [vmem:[#allocation2 + $0x8] sm:$0xff] %v373
      %376 = vrot.lane.b32.xlu0 %v343, 16
      %v377 = vpop.permute.xlu0 %376
      %378 = vrot.lane.b32.xlu0 %v345, 16
      %v379 = vpop.permute.xlu0 %378
      %380 = vrot.lane.b32.xlu0 %v344, 16
      %v381 = vpop.permute.xlu0 %380
      %382 = vrot.lane.b32.xlu0 %v346, 16
      %v383 = vpop.permute.xlu0 %382
      %vm384 = vcmp.lt.s32.totalorder %v356, 16
      %v385 = vsel %vm384, %v377, %v381
      %v386 = vsel %vm384, %v379, %v383
      %v387 = vsel %vm384, %v381, %v377
      %v388 = vsel %vm384, %v383, %v379
      %s389 = scalar_lea.vmem %s0, 2
      %v390 = vld [vmem:[%s389] sm:$0x3]
      %v392 = vperm.slane %v390, 0
      %v393 = vperm.slane %v390, 1
      %v396 = vmul.f32 %v387, %v392
      %v397 = vmul.f32 %v385, %v393
      %v398 = vmul.f32 %v388, %v392
      %v399 = vmul.f32 %v386, %v393
      %v400 = vpack.c.bf16 %v397, %v396
      %v401 = vpack.c.bf16 %v399, %v398
      %402 = vst [vmem:[#allocation2 + $0x10] sm:$0xff] %v400
      %403 = vst [vmem:[#allocation2 + $0x18] sm:$0xff] %v401
      %404 = vrot.lane.b32.xlu0 %v343, 15
      %v405 = vpop.permute.xlu0 %404
      %406 = vrot.lane.b32.xlu0 %v345, 15
      %v407 = vpop.permute.xlu0 %406
      %408 = vrot.lane.b32.xlu0 %v344, 15
      %v409 = vpop.permute.xlu0 %408
      %410 = vrot.lane.b32.xlu0 %v346, 15
      %v411 = vpop.permute.xlu0 %410
      %vm412 = vcmp.lt.s32.totalorder %v356, 15
      %v413 = vsel %vm412, %v405, %v409
      %v414 = vsel %vm412, %v407, %v411
      %v415 = vsel %vm412, %v409, %v405
      %v416 = vsel %vm412, %v411, %v407
      %s417 = scalar_lea.vmem %s0, 4
      %v418 = vld [vmem:[%s417] sm:$0x3]
      %v420 = vperm.slane %v418, 0
      %v421 = vperm.slane %v418, 1
      %v424 = vmul.f32 %v415, %v420
      %v425 = vmul.f32 %v413, %v421
      %v426 = vmul.f32 %v416, %v420
      %v427 = vmul.f32 %v414, %v421
      %v428 = vpack.c.bf16 %v425, %v424
      %v429 = vpack.c.bf16 %v427, %v426
      %430 = vst [vmem:[#allocation2 + $0x20] sm:$0xff] %v428
      %431 = vst [vmem:[#allocation2 + $0x28] sm:$0xff] %v429
      %432 = vrot.lane.b32.xlu0 %v343, 1
      %v433 = vpop.permute.xlu0 %432
      %434 = vrot.lane.b32.xlu0 %v345, 1
      %v435 = vpop.permute.xlu0 %434
      %436 = vrot.lane.b32.xlu0 %v344, 1
      %v437 = vpop.permute.xlu0 %436
      %438 = vrot.lane.b32.xlu0 %v346, 1
      %v439 = vpop.permute.xlu0 %438
      %vm440 = vcmp.lt.s32.totalorder %v356, 1
      %v441 = vsel %vm440, %v433, %v437
      %v442 = vsel %vm440, %v435, %v439
      %v443 = vsel %vm440, %v437, %v433
      %v444 = vsel %vm440, %v439, %v435
      %s445 = scalar_lea.vmem %s0, 6
      %v446 = vld [vmem:[%s445] sm:$0x3]
      %v448 = vperm.slane %v446, 0
      %v449 = vperm.slane %v446, 1
      %v452 = vmul.f32 %v443, %v448
      %v453 = vmul.f32 %v441, %v449
      %v454 = vmul.f32 %v444, %v448
      %v455 = vmul.f32 %v442, %v449
      %v456 = vpack.c.bf16 %v453, %v452
      %v457 = vpack.c.bf16 %v455, %v454
      %458 = vst [vmem:[#allocation2 + $0x30] sm:$0xff] %v456
      %459 = vst [vmem:[#allocation2 + $0x38] sm:$0xff] %v457
      %v460 = vpack.c.bf16 %v344, %v343
      %v461 = vpack.c.bf16 %v346, %v345
      %462 = vst [vmem:[#allocation2 + $0x40] sm:$0xff] %v460
      %463 = vst [vmem:[#allocation2 + $0x48] sm:$0xff] %v461
      %464 = vrot.lane.b32.xlu0 %v343, 127
      %v465 = vpop.permute.xlu0 %464
      %466 = vrot.lane.b32.xlu0 %v345, 127
      %v467 = vpop.permute.xlu0 %466
      %468 = vrot.lane.b32.xlu0 %v344, 127
      %v469 = vpop.permute.xlu0 %468
      %470 = vrot.lane.b32.xlu0 %v346, 127
      %v471 = vpop.permute.xlu0 %470
      %vm472 = vcmp.lt.s32.totalorder %v356, 127
      %v473 = vsel %vm472, %v465, %v469
      %v474 = vsel %vm472, %v467, %v471
      %v475 = vsel %vm472, %v469, %v465
      %v476 = vsel %vm472, %v471, %v467
      %s477 = scalar_lea.vmem %s0, 10
      %v478 = vld [vmem:[%s477] sm:$0x3]
      %v480 = vperm.slane %v478, 0
      %v481 = vperm.slane %v478, 1
      %v484 = vmul.f32 %v473, %v480
      %v485 = vmul.f32 %v475, %v481
      %v486 = vmul.f32 %v474, %v480
      %v487 = vmul.f32 %v476, %v481
      %v488 = vpack.c.bf16 %v485, %v484
      %v489 = vpack.c.bf16 %v487, %v486
      %490 = vst [vmem:[#allocation2 + $0x50] sm:$0xff] %v488
      %491 = vst [vmem:[#allocation2 + $0x58] sm:$0xff] %v489
      %492 = vrot.lane.b32.xlu0 %v343, 113
      %v493 = vpop.permute.xlu0 %492
      %494 = vrot.lane.b32.xlu0 %v345, 113
      %v495 = vpop.permute.xlu0 %494
      %496 = vrot.lane.b32.xlu0 %v344, 113
      %v497 = vpop.permute.xlu0 %496
      %498 = vrot.lane.b32.xlu0 %v346, 113
      %v499 = vpop.permute.xlu0 %498
      %vm500 = vcmp.lt.s32.totalorder %v356, 113
      %v501 = vsel %vm500, %v493, %v497
      %v502 = vsel %vm500, %v495, %v499
      %v503 = vsel %vm500, %v497, %v493
      %v504 = vsel %vm500, %v499, %v495
      %s505 = scalar_lea.vmem %s0, 12
      %v506 = vld [vmem:[%s505] sm:$0x3]
      %v508 = vperm.slane %v506, 0
      %v509 = vperm.slane %v506, 1
      %v512 = vmul.f32 %v501, %v508
      %v513 = vmul.f32 %v503, %v509
      %v514 = vmul.f32 %v502, %v508
      %v515 = vmul.f32 %v504, %v509
      %v516 = vpack.c.bf16 %v513, %v512
      %v517 = vpack.c.bf16 %v515, %v514
      %518 = vst [vmem:[#allocation2 + $0x60] sm:$0xff] %v516
      %519 = vst [vmem:[#allocation2 + $0x68] sm:$0xff] %v517
      %520 = vrot.lane.b32.xlu0 %v343, 112
      %v521 = vpop.permute.xlu0 %520
      %522 = vrot.lane.b32.xlu0 %v345, 112
      %v523 = vpop.permute.xlu0 %522
      %524 = vrot.lane.b32.xlu0 %v344, 112
      %v525 = vpop.permute.xlu0 %524
      %526 = vrot.lane.b32.xlu0 %v346, 112
      %v527 = vpop.permute.xlu0 %526
      %vm528 = vcmp.lt.s32.totalorder %v356, 112
      %v529 = vsel %vm528, %v521, %v525
      %v530 = vsel %vm528, %v523, %v527
      %v531 = vsel %vm528, %v525, %v521
      %v532 = vsel %vm528, %v527, %v523
      %s533 = scalar_lea.vmem %s0, 14
      %v534 = vld [vmem:[%s533] sm:$0x3]
      %v536 = vperm.slane %v534, 0
      %v537 = vperm.slane %v534, 1
      %v540 = vmul.f32 %v529, %v536
      %v541 = vmul.f32 %v531, %v537
      %v542 = vmul.f32 %v530, %v536
      %v543 = vmul.f32 %v532, %v537
      %v544 = vpack.c.bf16 %v541, %v540
      %v545 = vpack.c.bf16 %v543, %v542
      %546 = vst [vmem:[#allocation2 + $0x70] sm:$0xff] %v544
      %547 = vst [vmem:[#allocation2 + $0x78] sm:$0xff] %v545
      %548 = vrot.lane.b32.xlu0 %v343, 111
      %v549 = vpop.permute.xlu0 %548
      %550 = vrot.lane.b32.xlu0 %v345, 111
      %v551 = vpop.permute.xlu0 %550
      %552 = vrot.lane.b32.xlu0 %v344, 111
      %v553 = vpop.permute.xlu0 %552
      %554 = vrot.lane.b32.xlu0 %v346, 111
      %v555 = vpop.permute.xlu0 %554
      %vm556 = vcmp.lt.s32.totalorder %v356, 111
      %v557 = vsel %vm556, %v549, %v553
      %v558 = vsel %vm556, %v551, %v555
      %v559 = vsel %vm556, %v553, %v549
      %v560 = vsel %vm556, %v555, %v551
      %s561 = scalar_lea.vmem %s0, 16
      %v562 = vld [vmem:[%s561] sm:$0x3]
      %v564 = vperm.slane %v562, 0
      %v565 = vperm.slane %v562, 1
      %v568 = vmul.f32 %v557, %v564
      %v569 = vmul.f32 %v559, %v565
      %v570 = vmul.f32 %v558, %v564
      %v571 = vmul.f32 %v560, %v565
      %v572 = vpack.c.bf16 %v569, %v568
      %v573 = vpack.c.bf16 %v571, %v570
      %574 = vst [vmem:[#allocation2 + $0x80] sm:$0xff] %v572
      %575 = vst [vmem:[#allocation2 + $0x88] sm:$0xff] %v573
      %v576 = vld [vmem:[%s4] sm:$0xff]
      %v577 = vld [vmem:[%s4 + $0x8] sm:$0xff]
      %v578 = vld [vmem:[#allocation2] sm:$0xff]
      %v579 = vld [vmem:[#allocation2 + $0x8] sm:$0xff]
      %v580 = vld [vmem:[#allocation2 + $0x10] sm:$0xff]
      %v581 = vld [vmem:[#allocation2 + $0x18] sm:$0xff]
      %v582 = vld [vmem:[#allocation2 + $0x20] sm:$0xff]
      %v583 = vld [vmem:[#allocation2 + $0x28] sm:$0xff]
      %v584 = vld [vmem:[#allocation2 + $0x30] sm:$0xff]
      %v585 = vld [vmem:[#allocation2 + $0x38] sm:$0xff]
      %v586 = vld [vmem:[#allocation2 + $0x40] sm:$0xff]
      %v587 = vld [vmem:[#allocation2 + $0x48] sm:$0xff]
      %v588 = vld [vmem:[#allocation2 + $0x50] sm:$0xff]
      %v589 = vld [vmem:[#allocation2 + $0x58] sm:$0xff]
      %v590 = vld [vmem:[#allocation2 + $0x60] sm:$0xff]
      %v591 = vld [vmem:[#allocation2 + $0x68] sm:$0xff]
      %v592 = vld [vmem:[#allocation2 + $0x70] sm:$0xff]
      %v593 = vld [vmem:[#allocation2 + $0x78] sm:$0xff]
      %v594 = vld [vmem:[#allocation2 + $0x80] sm:$0xff]
      %v595 = vld [vmem:[#allocation2 + $0x88] sm:$0xff]
      %v598 = vunpack.c.l.b16 %v576
      %v599 = vunpack.c.h.b16 %v576
      %v600 = vunpack.c.l.b16 %v577
      %v601 = vunpack.c.h.b16 %v577
      %v602 = vpack.c.b16 %v600, %v598
      %v603 = vpack.c.b16 %v601, %v599
      %v623 = vunpack.c.l.b16 %v578
      %v624 = vunpack.c.h.b16 %v578
      %v625 = vunpack.c.l.b16 %v579
      %v626 = vunpack.c.h.b16 %v579
      %v627 = vunpack.c.l.b16 %v580
      %v628 = vunpack.c.h.b16 %v580
      %v629 = vunpack.c.l.b16 %v581
      %v630 = vunpack.c.h.b16 %v581
      %v631 = vunpack.c.l.b16 %v582
      %v632 = vunpack.c.h.b16 %v582
      %v633 = vunpack.c.l.b16 %v583
      %v634 = vunpack.c.h.b16 %v583
      %v635 = vunpack.c.l.b16 %v584
      %v636 = vunpack.c.h.b16 %v584
      %v637 = vunpack.c.l.b16 %v585
      %v638 = vunpack.c.h.b16 %v585
      %v639 = vunpack.c.l.b16 %v586
      %v640 = vunpack.c.h.b16 %v586
      %v641 = vunpack.c.l.b16 %v587
      %v642 = vunpack.c.h.b16 %v587
      %v643 = vunpack.c.l.b16 %v588
      %v644 = vunpack.c.h.b16 %v588
      %v645 = vunpack.c.l.b16 %v589
      %v646 = vunpack.c.h.b16 %v589
      %v647 = vunpack.c.l.b16 %v590
      %v648 = vunpack.c.h.b16 %v590
      %v649 = vunpack.c.l.b16 %v591
      %v650 = vunpack.c.h.b16 %v591
      %v651 = vunpack.c.l.b16 %v592
      %v652 = vunpack.c.h.b16 %v592
      %v653 = vunpack.c.l.b16 %v593
      %v654 = vunpack.c.h.b16 %v593
      %v655 = vunpack.c.l.b16 %v594
      %v656 = vunpack.c.h.b16 %v594
      %v657 = vunpack.c.l.b16 %v595
      %v658 = vunpack.c.h.b16 %v595
      %v659 = vpack.c.b16 %v625, %v623
      %v660 = vpack.c.b16 %v626, %v624
      %v661 = vpack.c.b16 %v629, %v627
      %v662 = vpack.c.b16 %v630, %v628
      %v663 = vpack.c.b16 %v633, %v631
      %v664 = vpack.c.b16 %v634, %v632
      %v665 = vpack.c.b16 %v637, %v635
      %v666 = vpack.c.b16 %v638, %v636
      %v667 = vpack.c.b16 %v641, %v639
      %v668 = vpack.c.b16 %v642, %v640
      %v669 = vpack.c.b16 %v645, %v643
      %v670 = vpack.c.b16 %v646, %v644
      %v671 = vpack.c.b16 %v649, %v647
      %v672 = vpack.c.b16 %v650, %v648
      %v673 = vpack.c.b16 %v653, %v651
      %v674 = vpack.c.b16 %v654, %v652
      %v675 = vpack.c.b16 %v657, %v655
      %v676 = vpack.c.b16 %v658, %v656
      %vm695 = vcmask 130048
      %v697 = vsel %vm695, %v603, 0
      %699 = vmatpush.bf16.msra.mxu0 %v673
      %700 = vmatpush.bf16.msra.mxu0 %v671
      %701 = vmatpush.bf16.msra.mxu0 %v669
      %702 = vmatpush.bf16.msra.mxu0 %v667
      %703 = vmatpush.bf16.msra.mxu0 %v665
      %704 = vmatpush.bf16.msra.mxu0 %v663
      %705 = vmatpush.bf16.msra.mxu0 %v661
      %706 = vmatpush.bf16.msra.mxu0 %v659
      %707 = vmatmul.bf16.gmra.mxu0 %v602
      %v708 = vpop.f32.mrf.mxu0
      %v709 = vadd.f32 0.0, %v708
      %v710 = vpop.f32.mrf.mxu0
      %v711 = vadd.f32 0.0, %v710
      %712 = vdwg.mxu0
      %713 = vmatpush.bf16.msra.mxu0 0
      %714 = vmatpush.bf16.msra.mxu0 0
      %715 = vmatpush.bf16.msra.mxu0 0
      %716 = vmatpush.bf16.msra.mxu0 0
      %717 = vmatpush.bf16.msra.mxu0 0
      %718 = vmatpush.bf16.msra.mxu0 0
      %719 = vmatpush.bf16.msra.mxu0 0
      %720 = vmatpush.bf16.msra.mxu0 %v675
      %721 = vmatmul.bf16.gmra.mxu0 %v697
      %v722 = vpop.f32.mrf.mxu0
      %v723 = vadd.f32 %v709, %v722
      %v724 = vpop.f32.mrf.mxu0
      %v725 = vadd.f32 %v711, %v724
      %726 = vdwg.mxu0
      %727 = vmatpush.bf16.msra.mxu0 %v674
      %728 = vmatpush.bf16.msra.mxu0 %v672
      %729 = vmatpush.bf16.msra.mxu0 %v670
      %730 = vmatpush.bf16.msra.mxu0 %v668
      %731 = vmatpush.bf16.msra.mxu0 %v666
      %732 = vmatpush.bf16.msra.mxu0 %v664
      %733 = vmatpush.bf16.msra.mxu0 %v662
      %734 = vmatpush.bf16.msra.mxu0 %v660
      %735 = vmatmul.bf16.gmra.mxu0 %v602
      %v736 = vpop.f32.mrf.mxu0
      %v737 = vadd.f32 0.0, %v736
      %v738 = vpop.f32.mrf.mxu0
      %v739 = vadd.f32 0.0, %v738
      %740 = vdwg.mxu0
      %741 = vmatpush.bf16.msra.mxu0 0
      %742 = vmatpush.bf16.msra.mxu0 0
      %743 = vmatpush.bf16.msra.mxu0 0
      %744 = vmatpush.bf16.msra.mxu0 0
      %745 = vmatpush.bf16.msra.mxu0 0
      %746 = vmatpush.bf16.msra.mxu0 0
      %747 = vmatpush.bf16.msra.mxu0 0
      %748 = vmatpush.bf16.msra.mxu0 %v676
      %749 = vmatmul.bf16.gmra.mxu0 %v697
      %v750 = vpop.f32.mrf.mxu0
      %v751 = vadd.f32 %v737, %v750
      %v752 = vpop.f32.mrf.mxu0
      %v753 = vadd.f32 %v739, %v752
      %754 = vdwg.mxu0
      %v755 = vpack.c.bf16 %v751, %v723
      %v756 = vpack.c.bf16 %v753, %v725
      %v757 = vunpack.c.l.bf16 %v755
      %v758 = vunpack.c.h.bf16 %v755
      %v759 = vunpack.c.l.bf16 %v756
      %v760 = vunpack.c.h.bf16 %v756
      %v761 = vadd.f32 %v757, %v758
      %762 = vadd.xlane.f32.xlu0 %v761
      %v763 = vpop.xlane.xlu0 %762
      %v764 = vadd.f32 %v759, %v760
      %765 = vadd.xlane.f32.xlu0 %v764
      %v766 = vpop.xlane.xlu0 %765
      %vm767 = vcmask 7168
      %768 = vst.msk [vmem:[%s298] sm:$0xff] %vm767, %v763
      %769 = vst.msk [vmem:[%s298 + $0x8] sm:$0xff] %vm767, %v766
      %v770 = vmul.f32 %v757, %v757
      %v771 = vmul.f32 %v758, %v758
      %v772 = vmul.f32 %v759, %v759
      %v773 = vmul.f32 %v760, %v760
      %v774 = vadd.f32 %v770, %v771
      %775 = vadd.xlane.f32.xlu0 %v774
      %v776 = vpop.xlane.xlu0 %775
      %v777 = vadd.f32 %v772, %v773
      %778 = vadd.xlane.f32.xlu0 %v777
      %v779 = vpop.xlane.xlu0 %778
      %780 = vst.msk [vmem:[%s303] sm:$0xff] %vm767, %v776
      %781 = vst.msk [vmem:[%s303 + $0x8] sm:$0xff] %vm767, %v779
      %782 = vst [vmem:[%s293] sm:$0xff] %v755
      %783 = vst [vmem:[%s293 + $0x8] sm:$0xff] %v756
      %p784 = scmp.lt.s32.totalorder %s19, 1
      %s785 = scalar_select %p784, %s19, 1
      %s786 = smul.addr %s785, 4
      %s787 = smul.addr %s786, 4
      %s788 = scalar_lea.vmem %s5, %s787
      %p789 = scmp.lt.s32.totalorder %s19, 1
      %s790 = scalar_select %p789, %s19, 1
      %s791 = smul.addr %s790, 2
      %s792 = smul.addr %s791, 8
      %s793 = scalar_lea.vmem %s6, %s792
      %p794 = scmp.lt.s32.totalorder %s19, 1
      %s795 = scalar_select %p794, %s19, 1
      %s796 = smul.addr %s795, 2
      %s797 = smul.addr %s796, 8
      %s798 = scalar_lea.vmem %s7, %s797
      // Predicated region
      $region41: #{residual_block_forward.4} parent=39 // pred_check
        %p799 = pneg %p147
      $region42: #{residual_block_forward.4} parent=39 // pred_check_branch
        %801 = sbr.rel (%p799) target = $region44
      $region43: #{residual_block_forward.4} parent=39 // pred_region
        _
      $region44: #{residual_block_forward.4} parent=39 // pred_fallthru
        _
      // Predicated region
      $region45: #{residual_block_forward.4} parent=39 // pred_check
        %p802 = pneg %p173
      $region46: #{residual_block_forward.4} parent=39 // pred_check_branch
        %804 = sbr.rel (%p802) target = $region48
      $region47: #{residual_block_forward.4} parent=39 // pred_region
        _
      $region48: #{residual_block_forward.4} parent=39 // pred_fallthru
        _
      // Predicated region
      $region49: #{residual_block_forward.4} parent=39 // pred_check
        %p805 = pneg %p199
      $region50: #{residual_block_forward.4} parent=39 // pred_check_branch
        %807 = sbr.rel (%p805) target = $region52
      $region51: #{residual_block_forward.4} parent=39 // pred_region
        _
      $region52: #{residual_block_forward.4} parent=39 // pred_fallthru
        _
    $region40: #{residual_block_forward.4} parent=5 // pred_fallthru
      _
    %p808 = scmp.le.s32.totalorder 2, %s14
    // Predicated region
    $region53: #{residual_block_forward.4} parent=5 // pred_check
      %p809 = pneg %p808
    $region54: #{residual_block_forward.4} parent=5 // pred_check_branch
      %811 = sbr.rel (%p809) target = $region56
    $region55: #{residual_block_forward.4} parent=5 // pred_region
      %s812 = ssub.s32 %s14, 2
      // Predicated region
      $region57: #{residual_block_forward.4} parent=55 // pred_check
        %p813 = pneg %p153
      $region58: #{residual_block_forward.4} parent=55 // pred_check_branch
        %815 = sbr.rel (%p813) target = $region60
      $region59: #{residual_block_forward.4} parent=55 // pred_region
        %p816 = scmp.lt.s32.totalorder %s20, 1
        %s817 = scalar_select %p816, %s20, 1
        %s818 = smul.addr %s817, 4
        %s819 = smul.addr %s818, 4
        %s820 = scalar_lea.vmem %s5, %s819
      $region60: #{residual_block_forward.4} parent=55 // pred_fallthru
        _
      // Predicated region
      $region61: #{residual_block_forward.4} parent=55 // pred_check
        %p821 = pneg %p179
      $region62: #{residual_block_forward.4} parent=55 // pred_check_branch
        %823 = sbr.rel (%p821) target = $region64
      $region63: #{residual_block_forward.4} parent=55 // pred_region
        %p824 = scmp.lt.s32.totalorder %s20, 1
        %s825 = scalar_select %p824, %s20, 1
        %s826 = smul.addr %s825, 2
        %s827 = smul.addr %s826, 8
        %s828 = scalar_lea.vmem %s6, %s827
      $region64: #{residual_block_forward.4} parent=55 // pred_fallthru
        _
      // Predicated region
      $region65: #{residual_block_forward.4} parent=55 // pred_check
        %p829 = pneg %p205
      $region66: #{residual_block_forward.4} parent=55 // pred_check_branch
        %831 = sbr.rel (%p829) target = $region68
      $region67: #{residual_block_forward.4} parent=55 // pred_region
        %p832 = scmp.lt.s32.totalorder %s20, 1
        %s833 = scalar_select %p832, %s20, 1
        %s834 = smul.addr %s833, 2
        %s835 = smul.addr %s834, 8
        %s836 = scalar_lea.vmem %s7, %s835
      $region68: #{residual_block_forward.4} parent=55 // pred_fallthru
        _
    $region56: #{residual_block_forward.4} parent=5 // pred_fallthru
      _
  $region6: #{residual_block_forward.4} parent=0 // loop_footer
    %s18 = sadd.s32 1, %s14
  $region7: #{residual_block_forward.4} parent=0 // loop_footer_branch
    %13 = sbr.rel target = $region3
  $region8: #{residual_block_forward.4} parent=0 // loop_exit
    _

</llo_original>
